<compile_context>
chip_gen: v5e
topology: v5e:2x2
jax: 0.10.0
libtpu: 0.0.40
codegen_flags: <defaults>
</compile_context>

<pallas_src>
import math
import functools

import jax
import jax.numpy as jnp
from jax import lax
from jax.experimental import pallas as pl
from jax.experimental.pallas import tpu as pltpu


def _single_modal_atten_kernel(x_ref, gamma_ref, beta_ref, gavg_ref,
                               wqkv_ref, bqkv_ref, wp_ref, bp_ref, o_ref, *,
                               num_heads, eps, compute_dtype, exp_dtype, approx_recip):
    _, C, T = x_ref.shape
    head_ch = C // num_heads

    x = x_ref[0].astype(jnp.float32)   # [C, T]  (I/O may be bf16; compute in f32)
    gamma = gamma_ref[...]             # [C, 1]  f32
    beta = beta_ref[...]               # [C, 1]  f32
    gavg = gavg_ref[...]               # [C, C]  f32 group-averaging matrix (precomputed)
    w_qkv = wqkv_ref[...]              # [3C, C] compute_dtype (q rows pre-scaled)
    b_qkv = bqkv_ref[...]              # [3C, 1] f32 (q rows pre-scaled)
    w_proj = wp_ref[...]               # [C, C]  compute_dtype
    b_proj = bp_ref[...]               # [C, 1]  f32

    # ---------------- GroupNorm(num_groups, C), two-pass (centered) variance ----------------
    s1 = jnp.sum(x, axis=1, keepdims=True)                        # [C, 1]
    mean_c = jnp.dot(gavg, s1, preferred_element_type=jnp.float32)  # [C, 1] per-channel group mean
    xc = x - mean_c                                               # [C, T]
    s2 = jnp.sum(xc * xc, axis=1, keepdims=True)                  # [C, 1]
    var_c = jnp.dot(gavg, s2, preferred_element_type=jnp.float32)   # [C, 1] per-channel group var
    xn = (xc * lax.rsqrt(var_c + eps)) * gamma + beta             # [C, T] f32

    # ---------------- qkv 1x1 conv: [3C, C] @ [C, T] + bias ----------------
    qkv = jnp.dot(w_qkv, xn.astype(compute_dtype),
                  preferred_element_type=jnp.float32) + b_qkv     # [3C, T] f32

    # ---------------- multi-head attention (all heads via two batched dots) ----------------
    q = qkv[0:C].astype(compute_dtype).reshape(num_heads, head_ch, T)        # pre-scaled
    k = qkv[C:2 * C].astype(compute_dtype).reshape(num_heads, head_ch, T)
    v = qkv[2 * C:3 * C].astype(compute_dtype).reshape(num_heads, head_ch, T)

    # scores[h, t, s] = sum_c q[h, c, t] * k[h, c, s]
    s = lax.dot_general(q, k, (((1,), (1,)), ((0,), (0,))),
                        preferred_element_type=jnp.float32)       # [H, T, T] f32
    s = s - jnp.max(s, axis=-1, keepdims=True)
    # Unnormalized softmax numerator; exp in exp_dtype (bf16 on v6e/v7x), AV operand dtype next.
    p = jnp.exp(s.astype(exp_dtype)).astype(compute_dtype)        # [H, T, T]

    itemsize = jnp.dtype(compute_dtype).itemsize
    sublane_tile = 8 * (4 // itemsize)                            # 8 for f32, 16 for bf16
    if head_ch % sublane_tile == 0:
        # Append a ones row per head so the SAME AV matmul also produces the softmax row sums
        # (f32 MXU accumulation), already in [H, 1, T] layout -> no extra reduce / transpose.
        ones_row = jnp.ones((num_heads, 1, T), dtype=compute_dtype)
        v1 = jnp.concatenate([v, ones_row], axis=1)               # [H, head_ch + 1, T]
        av = lax.dot_general(v1, p, (((2,), (2,)), ((0,), (0,))),
                             preferred_element_type=jnp.float32)  # [H, head_ch + 1, T]
        a_un = av[:, :head_ch, :]                                 # unnormalized accumulator
        l = av[:, head_ch:, :]                                    # [H, 1, T] row sums
    else:
        # Fallback (unaligned head_ch): separate ones-LHS matmul for the row sums.
        a_un = lax.dot_general(v, p, (((2,), (2,)), ((0,), (0,))),
                               preferred_element_type=jnp.float32)
        ones_lhs = jnp.ones((num_heads, 1, T), dtype=compute_dtype)
        l = lax.dot_general(ones_lhs, p, (((2,), (2,)), ((0,), (0,))),
                            preferred_element_type=jnp.float32)   # [H, 1, T]

    inv_l = pl.reciprocal(l, approx=approx_recip)                 # [H, 1, T]
    a = (a_un * inv_l).reshape(C, T)                              # normalize (C*T mults only)

    # ---------------- proj_out 1x1 conv + residual ----------------
    h_proj = jnp.dot(w_proj, a.astype(compute_dtype),
                     preferred_element_type=jnp.float32) + b_proj # [C, T] f32
    o_ref[0] = (x + h_proj).astype(o_ref.dtype)


def single_modal_atten(x, gamma, beta, w_qkv, b_qkv, w_proj, b_proj, *,
                       num_heads=4, num_groups=32, eps=1e-5,
                       compute_dtype=jnp.bfloat16, exp_dtype=None):
    """Fused forward pass of SingleModalAtten for x of shape [B, C, T]."""
    B, C, T = x.shape
    assert C % num_groups == 0, "GroupNorm requires channels divisible by num_groups"
    assert C % num_heads == 0, "channels must be divisible by num_heads"
    head_ch = C // num_heads
    # head_ch multiple of 8 keeps the per-head reshapes layout no-ops (sublane tile).
    assert head_ch % 8 == 0, "head channels must be a multiple of 8 for this kernel"
    if exp_dtype is None:
        exp_dtype = compute_dtype        # NOTE: on v5e (no bf16 EUP) pass exp_dtype=jnp.float32
    approx_recip = (jnp.dtype(compute_dtype) != jnp.dtype(jnp.float32))

    # Precompute the group-averaging matrix once:
    # gavg[i, j] = 1/(ch_per_group*T) if channels i and j share a group, else 0.
    ch_per_group = C // num_groups
    gid = jnp.arange(C, dtype=jnp.int32) // ch_per_group
    gavg = (gid[:, None] == gid[None, :]).astype(jnp.float32) / float(ch_per_group * T)

    gamma = jnp.reshape(gamma, (C, 1)).astype(jnp.float32)
    beta = jnp.reshape(beta, (C, 1)).astype(jnp.float32)
    # Fold the attention scale (scale^2 = 1/sqrt(head_ch), i.e. 1/ch**0.25 applied to q AND k)
    # into the q rows of the qkv conv weight/bias (one-time host-side scale).
    q_scale = 1.0 / math.sqrt(head_ch)
    row_scale = jnp.concatenate([jnp.full((C, 1), q_scale, jnp.float32),
                                 jnp.ones((2 * C, 1), jnp.float32)], axis=0)
    w_qkv = (jnp.reshape(w_qkv, (3 * C, C)).astype(jnp.float32) * row_scale).astype(compute_dtype)
    b_qkv = jnp.reshape(b_qkv, (3 * C, 1)).astype(jnp.float32) * row_scale
    w_proj = jnp.reshape(w_proj, (C, C)).astype(compute_dtype)
    b_proj = jnp.reshape(b_proj, (C, 1)).astype(jnp.float32)

    kernel = functools.partial(_single_modal_atten_kernel,
                               num_heads=num_heads, eps=eps,
                               compute_dtype=compute_dtype, exp_dtype=exp_dtype,
                               approx_recip=approx_recip)

    # VMEM budget, capped per chip generation (v7x: 64 MiB/TC, v5e/v6e: 128 MiB).
    wb = jnp.dtype(compute_dtype).itemsize
    eb = jnp.dtype(exp_dtype).itemsize
    xb = jnp.dtype(x.dtype).itemsize
    io_bytes = 2 * 2 * C * T * xb                                    # x + out blocks, dbl-buffered
    wgt_bytes = 2 * (C * C * 4 + 4 * C * C * wb + 6 * C * 128 * 4)   # gavg + weights + vectors
    itm_bytes = (10 * C * T * 4 + 6 * C * T * wb
                 + num_heads * T * T * (4 + eb + wb)
                 + 2 * num_heads * (head_ch + 8) * T * 4)
    try:
        vmem_cap = int(pltpu.get_tpu_info().vmem_capacity_bytes)
    except Exception:
        vmem_cap = 64 * 2 ** 20                                      # conservative: v7x per-TC
    vmem_limit = int(min(max(32 * 2 ** 20, 2 * (io_bytes + wgt_bytes + itm_bytes)),
                         vmem_cap - 8 * 2 ** 20))
    vmem_limit = max(vmem_limit, 16 * 2 ** 20)

    return pl.pallas_call(
        kernel,
        out_shape=jax.ShapeDtypeStruct((B, C, T), x.dtype),
        grid=(B,),
        in_specs=[
            pl.BlockSpec((1, C, T), lambda i: (i, 0, 0)),      # x (one batch element per step)
            pl.BlockSpec((C, 1), lambda i: (0, 0)),            # groupnorm gamma
            pl.BlockSpec((C, 1), lambda i: (0, 0)),            # groupnorm beta
            pl.BlockSpec((C, C), lambda i: (0, 0)),            # group-averaging matrix
            pl.BlockSpec((3 * C, C), lambda i: (0, 0)),        # qkv conv weight (k=1, q pre-scaled)
            pl.BlockSpec((3 * C, 1), lambda i: (0, 0)),        # qkv conv bias
            pl.BlockSpec((C, C), lambda i: (0, 0)),            # proj_out weight (k=1)
            pl.BlockSpec((C, 1), lambda i: (0, 0)),            # proj_out bias
        ],
        out_specs=pl.BlockSpec((1, C, T), lambda i: (i, 0, 0)),
        compiler_params=pltpu.CompilerParams(
            dimension_semantics=("parallel",),
            vmem_limit_bytes=vmem_limit),
    )(x, gamma, beta, gavg, w_qkv, b_qkv, w_proj, b_proj)


def reference(x, gamma, beta, w_qkv, b_qkv, w_proj, b_proj,
              num_heads=4, num_groups=32, eps=1e-5):
    """Pure-JAX f32 mirror of the PyTorch forward pass (for validation)."""
    B, C, T = x.shape
    xg = x.reshape(B, num_groups, C // num_groups, T)
    mean = xg.mean(axis=(2, 3), keepdims=True)
    var = xg.var(axis=(2, 3), keepdims=True)
    xn = ((xg - mean) / jnp.sqrt(var + eps)).reshape(B, C, T)
    xn = xn * gamma.reshape(1, C, 1) + beta.reshape(1, C, 1)
    qkv = jnp.einsum('oc,bct->bot', w_qkv.reshape(3 * C, C), xn) + b_qkv.reshape(1, -1, 1)
    ch = C // num_heads
    q, k, v = jnp.split(qkv, 3, axis=1)
    q = q.reshape(B * num_heads, ch, T)
    k = k.reshape(B * num_heads, ch, T)
    v = v.reshape(B * num_heads, ch, T)
    scale = 1.0 / math.sqrt(math.sqrt(ch))
    w = jnp.einsum('bct,bcs->bts', q * scale, k * scale)
    w = jax.nn.softmax(w, axis=-1)
    a = jnp.einsum('bts,bcs->bct', w, v).reshape(B, C, T)
    h = jnp.einsum('oc,bct->bot', w_proj.reshape(C, C), a) + b_proj.reshape(1, -1, 1)
    return x + h


if __name__ == "__main__":
    B, C, T = 2, 64, 128          # channels must be divisible by 32 (GroupNorm(32, C))
    num_heads, num_groups = 4, 32

    key = jax.random.PRNGKey(0)
    kx, kg, kb, kw, kwb, kp, kpb = jax.random.split(key, 7)

    x = jax.random.normal(kx, (B, C, T), dtype=jnp.float32)
    gamma = 1.0 + 0.1 * jax.random.normal(kg, (C,), dtype=jnp.float32)
    beta = 0.1 * jax.random.normal(kb, (C,), dtype=jnp.float32)
    w_qkv = 0.05 * jax.random.normal(kw, (3 * C, C), dtype=jnp.float32)   # Conv1d(C, 3C, 1) weight
    b_qkv = 0.01 * jax.random.normal(kwb, (3 * C,), dtype=jnp.float32)
    # Module zero-inits proj_out (zero_module) -> faithful output equals the input residual.
    w_proj_zero = jnp.zeros((C, C), dtype=jnp.float32)
    b_proj_zero = jnp.zeros((C,), dtype=jnp.float32)
    # Nonzero copies used only to numerically exercise / validate the full path.
    w_proj_rnd = 0.05 * jax.random.normal(kp, (C, C), dtype=jnp.float32)
    b_proj_rnd = 0.01 * jax.random.normal(kpb, (C,), dtype=jnp.float32)

    # 1) Faithful-to-__init__ run (proj_out zeroed): output must equal the input residual.
    out0 = jax.block_until_ready(single_modal_atten(
        x, gamma, beta, w_qkv, b_qkv, w_proj_zero, b_proj_zero,
        num_heads=num_heads, num_groups=num_groups))
    assert jnp.allclose(out0, x, atol=1e-6), "mismatch (zero proj)"

    ref = reference(x, gamma, beta, w_qkv, b_qkv, w_proj_rnd, b_proj_rnd,
                    num_heads=num_heads, num_groups=num_groups)

    # 2) Full-precision compute path (f32 MXU operands, exact reciprocal) -- tight tolerance.
    out_f32 = jax.block_until_ready(single_modal_atten(
        x, gamma, beta, w_qkv, b_qkv, w_proj_rnd, b_proj_rnd,
        num_heads=num_heads, num_groups=num_groups, compute_dtype=jnp.float32))
    assert jnp.allclose(out_f32, ref, atol=2e-3, rtol=2e-3), "mismatch (f32 compute)"

    # 3) Fast path (bf16 MXU operands + bf16 exp, f32 accumulation) -- bf16-level tolerance.
    out_bf16 = jax.block_until_ready(single_modal_atten(
        x, gamma, beta, w_qkv, b_qkv, w_proj_rnd, b_proj_rnd,
        num_heads=num_heads, num_groups=num_groups, compute_dtype=jnp.bfloat16))
    assert jnp.allclose(out_bf16, ref, atol=2e-2, rtol=2e-2), "mismatch (bf16 compute)"

    print("KERNEL_OK")
</pallas_src>

<mosaic_0001>
module attributes {stable_mosaic.version = 11 : i64} {
  func.func @_single_modal_atten_kernel(%arg0: i32, %arg1: memref<1x64x128xf32, #tpu.memory_space<vmem>>, %arg2: memref<64x1xf32, #tpu.memory_space<vmem>>, %arg3: memref<64x1xf32, #tpu.memory_space<vmem>>, %arg4: memref<64x64xf32, #tpu.memory_space<vmem>>, %arg5: memref<192x64xbf16, #tpu.memory_space<vmem>>, %arg6: memref<192x1xf32, #tpu.memory_space<vmem>>, %arg7: memref<64x64xbf16, #tpu.memory_space<vmem>>, %arg8: memref<64x1xf32, #tpu.memory_space<vmem>>, %arg9: memref<1x64x128xf32, #tpu.memory_space<vmem>>) attributes {dimension_semantics = [#tpu.dimension_semantics<parallel>], iteration_bounds = array<i64: 2>, scalar_prefetch = 0 : i64, scratch_operands = 0 : i64, tpu.core_type = #tpu.core_type<tc>, window_params = [{transform_indices = @transform_0, window_bounds = array<i64: 1, 64, 128>}, {pipeline_mode = #tpu.pipeline_mode<synchronous>, transform_indices = @transform_1, window_bounds = array<i64: 64, 1>}, {pipeline_mode = #tpu.pipeline_mode<synchronous>, transform_indices = @transform_2, window_bounds = array<i64: 64, 1>}, {pipeline_mode = #tpu.pipeline_mode<synchronous>, transform_indices = @transform_3, window_bounds = array<i64: 64, 64>}, {pipeline_mode = #tpu.pipeline_mode<synchronous>, transform_indices = @transform_4, window_bounds = array<i64: 192, 64>}, {pipeline_mode = #tpu.pipeline_mode<synchronous>, transform_indices = @transform_5, window_bounds = array<i64: 192, 1>}, {pipeline_mode = #tpu.pipeline_mode<synchronous>, transform_indices = @transform_6, window_bounds = array<i64: 64, 64>}, {pipeline_mode = #tpu.pipeline_mode<synchronous>, transform_indices = @transform_7, window_bounds = array<i64: 64, 1>}, {transform_indices = @transform_8, window_bounds = array<i64: 1, 64, 128>}]} {
    %c0 = arith.constant 0 : index
    %c0_0 = arith.constant 0 : index
    %c0_1 = arith.constant 0 : index
    %0 = vector.load %arg1[%c0, %c0_0, %c0_1] : memref<1x64x128xf32, #tpu.memory_space<vmem>>, vector<1x64x128xf32>
    %1 = vector.shape_cast %0 : vector<1x64x128xf32> to vector<64x128xf32>
    %c0_2 = arith.constant 0 : index
    %c0_3 = arith.constant 0 : index
    %2 = vector.load %arg2[%c0_2, %c0_3] : memref<64x1xf32, #tpu.memory_space<vmem>>, vector<64x1xf32>
    %c0_4 = arith.constant 0 : index
    %c0_5 = arith.constant 0 : index
    %3 = vector.load %arg3[%c0_4, %c0_5] : memref<64x1xf32, #tpu.memory_space<vmem>>, vector<64x1xf32>
    %c0_6 = arith.constant 0 : index
    %c0_7 = arith.constant 0 : index
    %4 = vector.load %arg4[%c0_6, %c0_7] : memref<64x64xf32, #tpu.memory_space<vmem>>, vector<64x64xf32>
    %c0_8 = arith.constant 0 : index
    %c0_9 = arith.constant 0 : index
    %5 = vector.load %arg5[%c0_8, %c0_9] : memref<192x64xbf16, #tpu.memory_space<vmem>>, vector<192x64xbf16>
    %c0_10 = arith.constant 0 : index
    %c0_11 = arith.constant 0 : index
    %6 = vector.load %arg6[%c0_10, %c0_11] : memref<192x1xf32, #tpu.memory_space<vmem>>, vector<192x1xf32>
    %c0_12 = arith.constant 0 : index
    %c0_13 = arith.constant 0 : index
    %7 = vector.load %arg7[%c0_12, %c0_13] : memref<64x64xbf16, #tpu.memory_space<vmem>>, vector<64x64xbf16>
    %c0_14 = arith.constant 0 : index
    %c0_15 = arith.constant 0 : index
    %8 = vector.load %arg8[%c0_14, %c0_15] : memref<64x1xf32, #tpu.memory_space<vmem>>, vector<64x1xf32>
    %cst = arith.constant dense<0.000000e+00> : vector<64xf32>
    %9 = vector.multi_reduction <add>, %1, %cst [1] : vector<64x128xf32> to vector<64xf32>
    %10 = vector.shape_cast %9 : vector<64xf32> to vector<64x1xf32>
    %cst_16 = arith.constant dense<0.000000e+00> : vector<64x1xf32>
    %11 = tpu.matmul %4, %10, %cst_16 {dimension_numbers = #tpu.dot_dimension_numbers<[1], [0], [0], [1], [0, 0, 1, 1], [], []>} : vector<64x64xf32>, vector<64x1xf32>, vector<64x1xf32> -> vector<64x1xf32>
    %12 = vector.broadcast %11 : vector<64x1xf32> to vector<64x128xf32>
    %13 = arith.subf %1, %12 : vector<64x128xf32>
    %14 = arith.mulf %13, %13 : vector<64x128xf32>
    %cst_17 = arith.constant dense<0.000000e+00> : vector<64xf32>
    %15 = vector.multi_reduction <add>, %14, %cst_17 [1] : vector<64x128xf32> to vector<64xf32>
    %16 = vector.shape_cast %15 : vector<64xf32> to vector<64x1xf32>
    %cst_18 = arith.constant dense<0.000000e+00> : vector<64x1xf32>
    %17 = tpu.matmul %4, %16, %cst_18 {dimension_numbers = #tpu.dot_dimension_numbers<[1], [0], [0], [1], [0, 0, 1, 1], [], []>} : vector<64x64xf32>, vector<64x1xf32>, vector<64x1xf32> -> vector<64x1xf32>
    %cst_19 = arith.constant 9.99999974E-6 : f32
    %18 = vector.broadcast %cst_19 : f32 to vector<64x1xf32>
    %19 = arith.addf %17, %18 : vector<64x1xf32>
    %20 = math.rsqrt %19 : vector<64x1xf32>
    %21 = vector.broadcast %20 : vector<64x1xf32> to vector<64x128xf32>
    %22 = arith.mulf %13, %21 : vector<64x128xf32>
    %23 = vector.broadcast %2 : vector<64x1xf32> to vector<64x128xf32>
    %24 = arith.mulf %22, %23 : vector<64x128xf32>
    %25 = vector.broadcast %3 : vector<64x1xf32> to vector<64x128xf32>
    %26 = arith.addf %24, %25 : vector<64x128xf32>
    %27 = arith.truncf %26 : vector<64x128xf32> to vector<64x128xbf16>
    %cst_20 = arith.constant dense<0.000000e+00> : vector<192x128xf32>
    %28 = tpu.matmul %5, %27, %cst_20 {dimension_numbers = #tpu.dot_dimension_numbers<[1], [0], [0], [1], [0, 0, 1, 1], [], []>} : vector<192x64xbf16>, vector<64x128xbf16>, vector<192x128xf32> -> vector<192x128xf32>
    %29 = vector.broadcast %6 : vector<192x1xf32> to vector<192x128xf32>
    %30 = arith.addf %28, %29 : vector<192x128xf32>
    %31 = vector.extract_strided_slice %30 {offsets = [0, 0], sizes = [64, 128], strides = [1, 1]} : vector<192x128xf32> to vector<64x128xf32>
    %32 = arith.truncf %31 : vector<64x128xf32> to vector<64x128xbf16>
    %33 = vector.shape_cast %32 : vector<64x128xbf16> to vector<4x16x128xbf16>
    %34 = vector.extract_strided_slice %30 {offsets = [64, 0], sizes = [64, 128], strides = [1, 1]} : vector<192x128xf32> to vector<64x128xf32>
    %35 = arith.truncf %34 : vector<64x128xf32> to vector<64x128xbf16>
    %36 = vector.shape_cast %35 : vector<64x128xbf16> to vector<4x16x128xbf16>
    %37 = vector.extract_strided_slice %30 {offsets = [128, 0], sizes = [64, 128], strides = [1, 1]} : vector<192x128xf32> to vector<64x128xf32>
    %38 = arith.truncf %37 : vector<64x128xf32> to vector<64x128xbf16>
    %39 = vector.shape_cast %38 : vector<64x128xbf16> to vector<4x16x128xbf16>
    %cst_21 = arith.constant dense<0.000000e+00> : vector<4x128x128xf32>
    %40 = tpu.matmul %33, %36, %cst_21 {dimension_numbers = #tpu.dot_dimension_numbers<[1], [1], [2], [2], [0, 0, 0, 2, 1, 2], [0], [0]>} : vector<4x16x128xbf16>, vector<4x16x128xbf16>, vector<4x128x128xf32> -> vector<4x128x128xf32>
    %cst_22 = arith.constant dense<0xFF800000> : vector<4x128xf32>
    %41 = vector.multi_reduction <maximumf>, %40, %cst_22 [2] : vector<4x128x128xf32> to vector<4x128xf32>
    %42 = vector.shape_cast %41 : vector<4x128xf32> to vector<4x128x1xf32>
    %43 = vector.broadcast %42 : vector<4x128x1xf32> to vector<4x128x128xf32>
    %44 = arith.subf %40, %43 : vector<4x128x128xf32>
    %45 = arith.truncf %44 : vector<4x128x128xf32> to vector<4x128x128xbf16>
    %46 = math.exp %45 : vector<4x128x128xbf16>
    %cst_23 = arith.constant 1.000000e+00 : bf16
    %47 = vector.broadcast %cst_23 : bf16 to vector<4x1x128xbf16>
    %48 = tpu.concatenate %39, %47 in 1 : vector<4x16x128xbf16>, vector<4x1x128xbf16> -> vector<4x17x128xbf16>
    %cst_24 = arith.constant dense<0.000000e+00> : vector<4x17x128xf32>
    %49 = tpu.matmul %48, %46, %cst_24 {dimension_numbers = #tpu.dot_dimension_numbers<[2], [2], [1], [1], [0, 0, 0, 1, 1, 1], [0], [0]>} : vector<4x17x128xbf16>, vector<4x128x128xbf16>, vector<4x17x128xf32> -> vector<4x17x128xf32>
    %50 = vector.extract_strided_slice %49 {offsets = [0, 0, 0], sizes = [4, 16, 128], strides = [1, 1, 1]} : vector<4x17x128xf32> to vector<4x16x128xf32>
    %51 = vector.extract_strided_slice %49 {offsets = [0, 16, 0], sizes = [4, 1, 128], strides = [1, 1, 1]} : vector<4x17x128xf32> to vector<4x1x128xf32>
    %52 = tpu.reciprocal %51 {approx = true} : vector<4x1x128xf32> -> vector<4x1x128xf32>
    %53 = vector.broadcast %52 : vector<4x1x128xf32> to vector<4x16x128xf32>
    %54 = arith.mulf %50, %53 : vector<4x16x128xf32>
    %55 = vector.shape_cast %54 : vector<4x16x128xf32> to vector<64x128xf32>
    %56 = arith.truncf %55 : vector<64x128xf32> to vector<64x128xbf16>
    %cst_25 = arith.constant dense<0.000000e+00> : vector<64x128xf32>
    %57 = tpu.matmul %7, %56, %cst_25 {dimension_numbers = #tpu.dot_dimension_numbers<[1], [0], [0], [1], [0, 0, 1, 1], [], []>} : vector<64x64xbf16>, vector<64x128xbf16>, vector<64x128xf32> -> vector<64x128xf32>
    %58 = vector.broadcast %8 : vector<64x1xf32> to vector<64x128xf32>
    %59 = arith.addf %57, %58 : vector<64x128xf32>
    %60 = arith.addf %1, %59 : vector<64x128xf32>
    %c0_26 = arith.constant 0 : index
    %c0_27 = arith.constant 0 : index
    %c0_28 = arith.constant 0 : index
    %61 = vector.load %arg9[%c0_26, %c0_27, %c0_28] : memref<1x64x128xf32, #tpu.memory_space<vmem>>, vector<1x64x128xf32>
    %62 = vector.shape_cast %61 : vector<1x64x128xf32> to vector<64x128xf32>
    %63 = vector.shape_cast %60 : vector<64x128xf32> to vector<1x64x128xf32>
    tpu.vector_store %arg9[%c0_26, %c0_27, %c0_28], %63 {strides = array<i32>} : memref<1x64x128xf32, #tpu.memory_space<vmem>>, vector<1x64x128xf32>,
    return
  }
  func.func @transform_0(%arg0: i32) -> (i32, i32, i32) {
    %c0_i32 = arith.constant 0 : i32
    %c0_i32_0 = arith.constant 0 : i32
    %c0_i32_1 = arith.constant 0 : i32
    return %arg0, %c0_i32, %c0_i32_0 : i32, i32, i32
  }
  func.func @transform_1(%arg0: i32) -> (i32, i32) {
    %c0_i32 = arith.constant 0 : i32
    %c0_i32_0 = arith.constant 0 : i32
    %c0_i32_1 = arith.constant 0 : i32
    return %c0_i32, %c0_i32_0 : i32, i32
  }
  func.func @transform_2(%arg0: i32) -> (i32, i32) {
    %c0_i32 = arith.constant 0 : i32
    %c0_i32_0 = arith.constant 0 : i32
    %c0_i32_1 = arith.constant 0 : i32
    return %c0_i32, %c0_i32_0 : i32, i32
  }
  func.func @transform_3(%arg0: i32) -> (i32, i32) {
    %c0_i32 = arith.constant 0 : i32
    %c0_i32_0 = arith.constant 0 : i32
    %c0_i32_1 = arith.constant 0 : i32
    return %c0_i32, %c0_i32_0 : i32, i32
  }
  func.func @transform_4(%arg0: i32) -> (i32, i32) {
    %c0_i32 = arith.constant 0 : i32
    %c0_i32_0 = arith.constant 0 : i32
    %c0_i32_1 = arith.constant 0 : i32
    return %c0_i32, %c0_i32_0 : i32, i32
  }
  func.func @transform_5(%arg0: i32) -> (i32, i32) {
    %c0_i32 = arith.constant 0 : i32
    %c0_i32_0 = arith.constant 0 : i32
    %c0_i32_1 = arith.constant 0 : i32
    return %c0_i32, %c0_i32_0 : i32, i32
  }
  func.func @transform_6(%arg0: i32) -> (i32, i32) {
    %c0_i32 = arith.constant 0 : i32
    %c0_i32_0 = arith.constant 0 : i32
    %c0_i32_1 = arith.constant 0 : i32
    return %c0_i32, %c0_i32_0 : i32, i32
  }
  func.func @transform_7(%arg0: i32) -> (i32, i32) {
    %c0_i32 = arith.constant 0 : i32
    %c0_i32_0 = arith.constant 0 : i32
    %c0_i32_1 = arith.constant 0 : i32
    return %c0_i32, %c0_i32_0 : i32, i32
  }
  func.func @transform_8(%arg0: i32) -> (i32, i32, i32) {
    %c0_i32 = arith.constant 0 : i32
    %c0_i32_0 = arith.constant 0 : i32
    %c0_i32_1 = arith.constant 0 : i32
    return %arg0, %c0_i32, %c0_i32_0 : i32, i32, i32
  }
}

</mosaic_0001>

<llo_original>
// kernel: tpu_custom_call.1
$region0: #{tpu_custom_call.1}
  #allocation0 [shape = 'u32[]', space=smem, size = 0x4, offset = 0x4, fixed_abs, tag = 'smem constant byte address 0x4 - core index']
  #allocation1 [shape = 'u32[72,128]{1,0:T(1,128)}', space=vmem, size = 0x9000, scoped, tag = 'internal scratch']
  %s0 = inlined_call_operand.vmem [shape: f32[2,64,128], index: 0, kind: input, shape index: {}]
  %s1 = inlined_call_operand.vmem [shape: f32[64,1], index: 1, kind: input, shape index: {}]
  %s2 = inlined_call_operand.vmem [shape: f32[64,1], index: 2, kind: input, shape index: {}]
  %s3 = inlined_call_operand.vmem [shape: f32[64,64], index: 3, kind: input, shape index: {}]
  %s4 = inlined_call_operand.vmem [shape: bf16[192,64], index: 4, kind: input, shape index: {}]
  %s5 = inlined_call_operand.vmem [shape: f32[192,1], index: 5, kind: input, shape index: {}]
  %s6 = inlined_call_operand.vmem [shape: bf16[64,64], index: 6, kind: input, shape index: {}]
  %s7 = inlined_call_operand.vmem [shape: f32[64,1], index: 7, kind: input, shape index: {}]
  %s8 = inlined_call_operand.hbm [shape: f32[2,64,128], index: 8, kind: output, shape index: {}]
  %s9 = sld [smem:[#allocation0]]
  $region65: #{tpu_custom_call.1} parent=0
    _
  %s11 = ssub.s32 1, %s9
  %s12 = scalar_select 0, %s11, %s9
  $region1: #{tpu_custom_call.1} parent=0
    #allocation2 [shape = 'u8[65536]{0}', space=vmem, size = 0x10000, scoped, tag = 'output window, operand 0']
    #allocation3 [shape = 's32[2]{0}', space=sflag, size = 0x8, scoped, tag = 'scoped memory for tpu_custom_call.1']
    %13 = vsyncpa [#allocation3], 0
    %s14 = scalar_lea.sflag [#allocation3], 1
    %15 = vsyncpa %s14, 0
    loop: start=0, step=1, limit=4
    $region2: #{tpu_custom_call.1} parent=1 // loop_pre_header
      _
    $region3: #{tpu_custom_call.1} parent=1 // loop_header
      %s17 = sphi 0, %s21
      %p18 = scmp.ge.s32.totalorder %s17, 4
      %s27 = sphi 0, %s29
      %s30 = sphi 0, %s27
      %s31 = sphi 0, %s30
      %s47 = sphi 0, %s31
      %s51 = sphi 0, %s51
      %s53 = sphi 0, %s51
      %s54 = sphi 0, %s53
      %s68 = sphi 0, %s54
      %s72 = sphi 0, %s72
      %s74 = sphi 0, %s72
      %s75 = sphi 0, %s74
      %s89 = sphi 0, %s75
      %s93 = sphi 0, %s93
      %s95 = sphi 0, %s93
      %s96 = sphi 0, %s95
      %s110 = sphi 0, %s96
      %s114 = sphi 0, %s114
      %s116 = sphi 0, %s114
      %s117 = sphi 0, %s116
      %s131 = sphi 0, %s117
      %s135 = sphi 0, %s135
      %s137 = sphi 0, %s135
      %s138 = sphi 0, %s137
      %s152 = sphi 0, %s138
      %s156 = sphi 0, %s156
      %s158 = sphi 0, %s156
      %s159 = sphi 0, %s158
      %s173 = sphi 0, %s159
      %s177 = sphi 0, %s177
      %s179 = sphi 0, %s177
      %s180 = sphi 0, %s179
      %s194 = sphi 0, %s180
      %s200 = sphi 0, %s202
      %s203 = sphi 0, %s200
      %s204 = sphi 0, %s203
      %s220 = sphi 0, %s204
    $region4: #{tpu_custom_call.1} parent=1 // loop_header_branch
      %20 = sbr.rel (%p18) target = $region8
    $region5: #{tpu_custom_call.1} parent=1 // loop_body
      %s22 = ssub.s32 %s17, 1
      %s23 = ssub.s32 %s17, 2
      %s24 = sadd.s32 %s17, 1
      %s25 = ssub.s32 %s17, %s24
      %p26 = scmp.eq.s32.totalorder %s25, 0
      %s28 = sadd.s32 %s27, 1
      %s29 = scalar_select %p26, %s27, %s28
      %p32 = pneg %p26
      %p33 = scmp.eq.s32.totalorder %s17, 1
      %p34 = por %p32, %p33
      %p35 = scmp.ne.s32.totalorder %s27, %s30
      %p36 = scmp.eq.s32.totalorder %s17, 0
      %p37 = por %p35, %p36
      %p38 = scmp.ne.s32.totalorder %s27, %s30
      %p39 = scmp.eq.s32.totalorder %s22, 1
      %p40 = por %p38, %p39
      %p41 = scmp.ne.s32.totalorder %s30, %s31
      %p42 = scmp.eq.s32.totalorder %s22, 0
      %p43 = por %p41, %p42
      %p44 = scmp.ne.s32.totalorder %s30, %s31
      %p45 = scmp.eq.s32.totalorder %s23, 1
      %p46 = por %p44, %p45
      %p48 = scmp.ne.s32.totalorder %s31, %s47
      %p49 = scmp.eq.s32.totalorder %s23, 0
      %p50 = por %p48, %p49
      %s52 = sadd.s32 %s51, 1
      %p55 = scmp.eq.s32.totalorder %s17, 1
      %p56 = scmp.ne.s32.totalorder %s51, %s53
      %p57 = scmp.eq.s32.totalorder %s17, 0
      %p58 = por %p56, %p57
      %p59 = scmp.ne.s32.totalorder %s51, %s53
      %p60 = scmp.eq.s32.totalorder %s22, 1
      %p61 = por %p59, %p60
      %p62 = scmp.ne.s32.totalorder %s53, %s54
      %p63 = scmp.eq.s32.totalorder %s22, 0
      %p64 = por %p62, %p63
      %p65 = scmp.ne.s32.totalorder %s53, %s54
      %p66 = scmp.eq.s32.totalorder %s23, 1
      %p67 = por %p65, %p66
      %p69 = scmp.ne.s32.totalorder %s54, %s68
      %p70 = scmp.eq.s32.totalorder %s23, 0
      %p71 = por %p69, %p70
      %s73 = sadd.s32 %s72, 1
      %p76 = scmp.eq.s32.totalorder %s17, 1
      %p77 = scmp.ne.s32.totalorder %s72, %s74
      %p78 = scmp.eq.s32.totalorder %s17, 0
      %p79 = por %p77, %p78
      %p80 = scmp.ne.s32.totalorder %s72, %s74
      %p81 = scmp.eq.s32.totalorder %s22, 1
      %p82 = por %p80, %p81
      %p83 = scmp.ne.s32.totalorder %s74, %s75
      %p84 = scmp.eq.s32.totalorder %s22, 0
      %p85 = por %p83, %p84
      %p86 = scmp.ne.s32.totalorder %s74, %s75
      %p87 = scmp.eq.s32.totalorder %s23, 1
      %p88 = por %p86, %p87
      %p90 = scmp.ne.s32.totalorder %s75, %s89
      %p91 = scmp.eq.s32.totalorder %s23, 0
      %p92 = por %p90, %p91
      %s94 = sadd.s32 %s93, 1
      %p97 = scmp.eq.s32.totalorder %s17, 1
      %p98 = scmp.ne.s32.totalorder %s93, %s95
      %p99 = scmp.eq.s32.totalorder %s17, 0
      %p100 = por %p98, %p99
      %p101 = scmp.ne.s32.totalorder %s93, %s95
      %p102 = scmp.eq.s32.totalorder %s22, 1
      %p103 = por %p101, %p102
      %p104 = scmp.ne.s32.totalorder %s95, %s96
      %p105 = scmp.eq.s32.totalorder %s22, 0
      %p106 = por %p104, %p105
      %p107 = scmp.ne.s32.totalorder %s95, %s96
      %p108 = scmp.eq.s32.totalorder %s23, 1
      %p109 = por %p107, %p108
      %p111 = scmp.ne.s32.totalorder %s96, %s110
      %p112 = scmp.eq.s32.totalorder %s23, 0
      %p113 = por %p111, %p112
      %s115 = sadd.s32 %s114, 1
      %p118 = scmp.eq.s32.totalorder %s17, 1
      %p119 = scmp.ne.s32.totalorder %s114, %s116
      %p120 = scmp.eq.s32.totalorder %s17, 0
      %p121 = por %p119, %p120
      %p122 = scmp.ne.s32.totalorder %s114, %s116
      %p123 = scmp.eq.s32.totalorder %s22, 1
      %p124 = por %p122, %p123
      %p125 = scmp.ne.s32.totalorder %s116, %s117
      %p126 = scmp.eq.s32.totalorder %s22, 0
      %p127 = por %p125, %p126
      %p128 = scmp.ne.s32.totalorder %s116, %s117
      %p129 = scmp.eq.s32.totalorder %s23, 1
      %p130 = por %p128, %p129
      %p132 = scmp.ne.s32.totalorder %s117, %s131
      %p133 = scmp.eq.s32.totalorder %s23, 0
      %p134 = por %p132, %p133
      %s136 = sadd.s32 %s135, 1
      %p139 = scmp.eq.s32.totalorder %s17, 1
      %p140 = scmp.ne.s32.totalorder %s135, %s137
      %p141 = scmp.eq.s32.totalorder %s17, 0
      %p142 = por %p140, %p141
      %p143 = scmp.ne.s32.totalorder %s135, %s137
      %p144 = scmp.eq.s32.totalorder %s22, 1
      %p145 = por %p143, %p144
      %p146 = scmp.ne.s32.totalorder %s137, %s138
      %p147 = scmp.eq.s32.totalorder %s22, 0
      %p148 = por %p146, %p147
      %p149 = scmp.ne.s32.totalorder %s137, %s138
      %p150 = scmp.eq.s32.totalorder %s23, 1
      %p151 = por %p149, %p150
      %p153 = scmp.ne.s32.totalorder %s138, %s152
      %p154 = scmp.eq.s32.totalorder %s23, 0
      %p155 = por %p153, %p154
      %s157 = sadd.s32 %s156, 1
      %p160 = scmp.eq.s32.totalorder %s17, 1
      %p161 = scmp.ne.s32.totalorder %s156, %s158
      %p162 = scmp.eq.s32.totalorder %s17, 0
      %p163 = por %p161, %p162
      %p164 = scmp.ne.s32.totalorder %s156, %s158
      %p165 = scmp.eq.s32.totalorder %s22, 1
      %p166 = por %p164, %p165
      %p167 = scmp.ne.s32.totalorder %s158, %s159
      %p168 = scmp.eq.s32.totalorder %s22, 0
      %p169 = por %p167, %p168
      %p170 = scmp.ne.s32.totalorder %s158, %s159
      %p171 = scmp.eq.s32.totalorder %s23, 1
      %p172 = por %p170, %p171
      %p174 = scmp.ne.s32.totalorder %s159, %s173
      %p175 = scmp.eq.s32.totalorder %s23, 0
      %p176 = por %p174, %p175
      %s178 = sadd.s32 %s177, 1
      %p181 = scmp.eq.s32.totalorder %s17, 1
      %p182 = scmp.ne.s32.totalorder %s177, %s179
      %p183 = scmp.eq.s32.totalorder %s17, 0
      %p184 = por %p182, %p183
      %p185 = scmp.ne.s32.totalorder %s177, %s179
      %p186 = scmp.eq.s32.totalorder %s22, 1
      %p187 = por %p185, %p186
      %p188 = scmp.ne.s32.totalorder %s179, %s180
      %p189 = scmp.eq.s32.totalorder %s22, 0
      %p190 = por %p188, %p189
      %p191 = scmp.ne.s32.totalorder %s179, %s180
      %p192 = scmp.eq.s32.totalorder %s23, 1
      %p193 = por %p191, %p192
      %p195 = scmp.ne.s32.totalorder %s180, %s194
      %p196 = scmp.eq.s32.totalorder %s23, 0
      %p197 = por %p195, %p196
      %s198 = ssub.s32 %s17, %s24
      %p199 = scmp.eq.s32.totalorder %s198, 0
      %s201 = sadd.s32 %s200, 1
      %s202 = scalar_select %p199, %s200, %s201
      %p205 = pneg %p199
      %p206 = scmp.eq.s32.totalorder %s17, 1
      %p207 = por %p205, %p206
      %p208 = scmp.ne.s32.totalorder %s200, %s203
      %p209 = scmp.eq.s32.totalorder %s17, 0
      %p210 = por %p208, %p209
      %p211 = scmp.ne.s32.totalorder %s200, %s203
      %p212 = scmp.eq.s32.totalorder %s22, 1
      %p213 = por %p211, %p212
      %p214 = scmp.ne.s32.totalorder %s203, %s204
      %p215 = scmp.eq.s32.totalorder %s22, 0
      %p216 = por %p214, %p215
      %p217 = scmp.ne.s32.totalorder %s203, %s204
      %p218 = scmp.eq.s32.totalorder %s23, 1
      %p219 = por %p217, %p218
      %p221 = scmp.ne.s32.totalorder %s204, %s220
      %p222 = scmp.eq.s32.totalorder %s23, 0
      %p223 = por %p221, %p222
      %p224 = scmp.le.s32.totalorder 1, %s17
      %p225 = scmp.lt.s32.totalorder %s17, 3
      %p226 = pnand %p224, %p225
      %p227 = pneg %p226
      // Predicated region
      $region9: #{tpu_custom_call.1} parent=5 // pred_check
        _
      $region10: #{tpu_custom_call.1} parent=5 // pred_check_branch
        %229 = sbr.rel (%p226) target = $region12
      $region11: #{tpu_custom_call.1} parent=5 // pred_region
        %s230 = ssub.s32 %s17, 1
        // Predicated region
        $region13: #{tpu_custom_call.1} parent=11 // pred_check
          %p231 = pneg %p64
        $region14: #{tpu_custom_call.1} parent=11 // pred_check_branch
          %233 = sbr.rel (%p231) target = $region16
        $region15: #{tpu_custom_call.1} parent=11 // pred_region
          _
        $region16: #{tpu_custom_call.1} parent=11 // pred_fallthru
          _
        // Predicated region
        $region17: #{tpu_custom_call.1} parent=11 // pred_check
          %p234 = pneg %p85
        $region18: #{tpu_custom_call.1} parent=11 // pred_check_branch
          %236 = sbr.rel (%p234) target = $region20
        $region19: #{tpu_custom_call.1} parent=11 // pred_region
          _
        $region20: #{tpu_custom_call.1} parent=11 // pred_fallthru
          _
        // Predicated region
        $region21: #{tpu_custom_call.1} parent=11 // pred_check
          %p237 = pneg %p106
        $region22: #{tpu_custom_call.1} parent=11 // pred_check_branch
          %239 = sbr.rel (%p237) target = $region24
        $region23: #{tpu_custom_call.1} parent=11 // pred_region
          _
        $region24: #{tpu_custom_call.1} parent=11 // pred_fallthru
          _
        // Predicated region
        $region25: #{tpu_custom_call.1} parent=11 // pred_check
          %p240 = pneg %p127
        $region26: #{tpu_custom_call.1} parent=11 // pred_check_branch
          %242 = sbr.rel (%p240) target = $region28
        $region27: #{tpu_custom_call.1} parent=11 // pred_region
          _
        $region28: #{tpu_custom_call.1} parent=11 // pred_fallthru
          _
        // Predicated region
        $region29: #{tpu_custom_call.1} parent=11 // pred_check
          %p243 = pneg %p148
        $region30: #{tpu_custom_call.1} parent=11 // pred_check_branch
          %245 = sbr.rel (%p243) target = $region32
        $region31: #{tpu_custom_call.1} parent=11 // pred_region
          _
        $region32: #{tpu_custom_call.1} parent=11 // pred_fallthru
          _
        // Predicated region
        $region33: #{tpu_custom_call.1} parent=11 // pred_check
          %p246 = pneg %p169
        $region34: #{tpu_custom_call.1} parent=11 // pred_check_branch
          %248 = sbr.rel (%p246) target = $region36
        $region35: #{tpu_custom_call.1} parent=11 // pred_region
          _
        $region36: #{tpu_custom_call.1} parent=11 // pred_fallthru
          _
        // Predicated region
        $region37: #{tpu_custom_call.1} parent=11 // pred_check
          %p249 = pneg %p190
        $region38: #{tpu_custom_call.1} parent=11 // pred_check_branch
          %251 = sbr.rel (%p249) target = $region40
        $region39: #{tpu_custom_call.1} parent=11 // pred_region
          _
        $region40: #{tpu_custom_call.1} parent=11 // pred_fallthru
          _
      $region12: #{tpu_custom_call.1} parent=5 // pred_fallthru
        _
      %p252 = scmp.lt.s32.totalorder %s17, 2
      // Predicated region
      $region41: #{tpu_custom_call.1} parent=5 // pred_check
        %p253 = pneg %p252
      $region42: #{tpu_custom_call.1} parent=5 // pred_check_branch
        %255 = sbr.rel (%p253) target = $region44
      $region43: #{tpu_custom_call.1} parent=5 // pred_region
        // Predicated region
        $region45: #{tpu_custom_call.1} parent=43 // pred_check
          %p256 = pneg %p37
        $region46: #{tpu_custom_call.1} parent=43 // pred_check_branch
          %258 = sbr.rel (%p256) target = $region48
        $region47: #{tpu_custom_call.1} parent=43 // pred_region
          %p259 = scmp.lt.s32.totalorder %s17, 1
          %s260 = scalar_select %p259, %s17, 1
          %s261 = smul.addr %s260, 8
          %s262 = smul.addr %s261, 8
          %s263 = scalar_lea.vmem %s0, %s262
        $region48: #{tpu_custom_call.1} parent=43 // pred_fallthru
          _
      $region44: #{tpu_custom_call.1} parent=5 // pred_fallthru
        _
      %p264 = scmp.le.s32.totalorder 1, %s17
      %p265 = scmp.lt.s32.totalorder %s17, 3
      %p266 = pnand %p264, %p265
      %p267 = pneg %p266
      // Predicated region
      $region49: #{tpu_custom_call.1} parent=5 // pred_check
        _
      $region50: #{tpu_custom_call.1} parent=5 // pred_check_branch
        %269 = sbr.rel (%p266) target = $region52
      $region51: #{tpu_custom_call.1} parent=5 // pred_region
        %s270 = ssub.s32 %s17, 1
        %p271 = scmp.lt.s32.totalorder %s22, 1
        %s272 = scalar_select %p271, %s22, 1
        %s273 = smul.addr %s272, 8
        %s274 = smul.addr %s273, 8
        %s275 = scalar_lea.vmem %s0, %s274
        %p276 = pneg %p43
        %p277 = pneg %p40
        %p278 = pneg %p64
        %p279 = pneg %p61
        %p280 = pneg %p85
        %p281 = pneg %p82
        %p282 = pneg %p106
        %p283 = pneg %p103
        %p284 = pneg %p127
        %p285 = pneg %p124
        %p286 = pneg %p148
        %p287 = pneg %p145
        %p288 = pneg %p169
        %p289 = pneg %p166
        %p290 = pneg %p190
        %p291 = pneg %p187
        %p292 = pneg %p216
        %p293 = pneg %p213
        %s294 = sand.u32 %s203, 1
        %s295 = scalar_lea.sflag [#allocation3], %s294
        %s296 = sand.u32 %s203, 1
        %s297 = smul.addr %s296, 64
        %s298 = scalar_lea.vmem [#allocation2], %s297
        %p299 = scmp.lt.s32.totalorder %s22, 1
        %s300 = scalar_select %p299, %s22, 1
        %s301 = smul.addr %s300, 8
        %s302 = smul.addr %s301, 8
        %s303 = scalar_lea.vmem %s0, %s302
        %v306 = vld [vmem:[%s303] sm:$0xff]
        %v307 = vld [vmem:[%s303 + $0x8] sm:$0xff]
        %v308 = vld [vmem:[%s303 + $0x10] sm:$0xff]
        %v309 = vld [vmem:[%s303 + $0x18] sm:$0xff]
        %v310 = vld [vmem:[%s303 + $0x20] sm:$0xff]
        %v311 = vld [vmem:[%s303 + $0x28] sm:$0xff]
        %v312 = vld [vmem:[%s303 + $0x30] sm:$0xff]
        %v313 = vld [vmem:[%s303 + $0x38] sm:$0xff]
        %v314 = vld [vmem:[%s1] sm:$0xff]
        %v315 = vld [vmem:[%s1 + $0x8] sm:$0xff]
        %v316 = vld [vmem:[%s1 + $0x10] sm:$0xff]
        %v317 = vld [vmem:[%s1 + $0x18] sm:$0xff]
        %v318 = vld [vmem:[%s1 + $0x20] sm:$0xff]
        %v319 = vld [vmem:[%s1 + $0x28] sm:$0xff]
        %v320 = vld [vmem:[%s1 + $0x30] sm:$0xff]
        %v321 = vld [vmem:[%s1 + $0x38] sm:$0xff]
        %v322 = vld [vmem:[%s2] sm:$0xff]
        %v323 = vld [vmem:[%s2 + $0x8] sm:$0xff]
        %v324 = vld [vmem:[%s2 + $0x10] sm:$0xff]
        %v325 = vld [vmem:[%s2 + $0x18] sm:$0xff]
        %v326 = vld [vmem:[%s2 + $0x20] sm:$0xff]
        %v327 = vld [vmem:[%s2 + $0x28] sm:$0xff]
        %v328 = vld [vmem:[%s2 + $0x30] sm:$0xff]
        %v329 = vld [vmem:[%s2 + $0x38] sm:$0xff]
        %v330 = vld [vmem:[%s3] sm:$0xff]
        %v331 = vld [vmem:[%s3 + $0x8] sm:$0xff]
        %v332 = vld [vmem:[%s3 + $0x10] sm:$0xff]
        %v333 = vld [vmem:[%s3 + $0x18] sm:$0xff]
        %v334 = vld [vmem:[%s3 + $0x20] sm:$0xff]
        %v335 = vld [vmem:[%s3 + $0x28] sm:$0xff]
        %v336 = vld [vmem:[%s3 + $0x30] sm:$0xff]
        %v337 = vld [vmem:[%s3 + $0x38] sm:$0xff]
        %v338 = vld [vmem:[%s4] sm:$0xf]
        %v339 = vld [vmem:[%s4 + $0x4] sm:$0xf]
        %v340 = vld [vmem:[%s4 + $0x8] sm:$0xf]
        %v341 = vld [vmem:[%s4 + $0xc] sm:$0xf]
        %v342 = vld [vmem:[%s4 + $0x10] sm:$0xf]
        %v343 = vld [vmem:[%s4 + $0x14] sm:$0xf]
        %v344 = vld [vmem:[%s4 + $0x18] sm:$0xf]
        %v345 = vld [vmem:[%s4 + $0x1c] sm:$0xf]
        %v346 = vld [vmem:[%s4 + $0x20] sm:$0xf]
        %v347 = vld [vmem:[%s4 + $0x24] sm:$0xf]
        %v348 = vld [vmem:[%s4 + $0x28] sm:$0xf]
        %v349 = vld [vmem:[%s4 + $0x2c] sm:$0xf]
        %v350 = vld [vmem:[%s4 + $0x30] sm:$0xf]
        %v351 = vld [vmem:[%s4 + $0x34] sm:$0xf]
        %v352 = vld [vmem:[%s4 + $0x38] sm:$0xf]
        %v353 = vld [vmem:[%s4 + $0x3c] sm:$0xf]
        %v354 = vld [vmem:[%s4 + $0x40] sm:$0xf]
        %v355 = vld [vmem:[%s4 + $0x44] sm:$0xf]
        %v356 = vld [vmem:[%s4 + $0x48] sm:$0xf]
        %v357 = vld [vmem:[%s4 + $0x4c] sm:$0xf]
        %v358 = vld [vmem:[%s4 + $0x50] sm:$0xf]
        %v359 = vld [vmem:[%s4 + $0x54] sm:$0xf]
        %v360 = vld [vmem:[%s4 + $0x58] sm:$0xf]
        %v361 = vld [vmem:[%s4 + $0x5c] sm:$0xf]
        %v362 = vld [vmem:[%s5] sm:$0xff]
        %v363 = vld [vmem:[%s5 + $0x8] sm:$0xff]
        %v364 = vld [vmem:[%s5 + $0x10] sm:$0xff]
        %v365 = vld [vmem:[%s5 + $0x18] sm:$0xff]
        %v366 = vld [vmem:[%s5 + $0x20] sm:$0xff]
        %v367 = vld [vmem:[%s5 + $0x28] sm:$0xff]
        %v368 = vld [vmem:[%s5 + $0x30] sm:$0xff]
        %v369 = vld [vmem:[%s5 + $0x38] sm:$0xff]
        %v370 = vld [vmem:[%s5 + $0x40] sm:$0xff]
        %v371 = vld [vmem:[%s5 + $0x48] sm:$0xff]
        %v372 = vld [vmem:[%s5 + $0x50] sm:$0xff]
        %v373 = vld [vmem:[%s5 + $0x58] sm:$0xff]
        %v374 = vld [vmem:[%s5 + $0x60] sm:$0xff]
        %v375 = vld [vmem:[%s5 + $0x68] sm:$0xff]
        %v376 = vld [vmem:[%s5 + $0x70] sm:$0xff]
        %v377 = vld [vmem:[%s5 + $0x78] sm:$0xff]
        %v378 = vld [vmem:[%s5 + $0x80] sm:$0xff]
        %v379 = vld [vmem:[%s5 + $0x88] sm:$0xff]
        %v380 = vld [vmem:[%s5 + $0x90] sm:$0xff]
        %v381 = vld [vmem:[%s5 + $0x98] sm:$0xff]
        %v382 = vld [vmem:[%s5 + $0xa0] sm:$0xff]
        %v383 = vld [vmem:[%s5 + $0xa8] sm:$0xff]
        %v384 = vld [vmem:[%s5 + $0xb0] sm:$0xff]
        %v385 = vld [vmem:[%s5 + $0xb8] sm:$0xff]
        %v386 = vld [vmem:[%s6] sm:$0xf]
        %v387 = vld [vmem:[%s6 + $0x4] sm:$0xf]
        %v388 = vld [vmem:[%s6 + $0x8] sm:$0xf]
        %v389 = vld [vmem:[%s6 + $0xc] sm:$0xf]
        %v390 = vld [vmem:[%s6 + $0x10] sm:$0xf]
        %v391 = vld [vmem:[%s6 + $0x14] sm:$0xf]
        %v392 = vld [vmem:[%s6 + $0x18] sm:$0xf]
        %v393 = vld [vmem:[%s6 + $0x1c] sm:$0xf]
        %v394 = vld [vmem:[%s7] sm:$0xff]
        %v395 = vld [vmem:[%s7 + $0x8] sm:$0xff]
        %v396 = vld [vmem:[%s7 + $0x10] sm:$0xff]
        %v397 = vld [vmem:[%s7 + $0x18] sm:$0xff]
        %v398 = vld [vmem:[%s7 + $0x20] sm:$0xff]
        %v399 = vld [vmem:[%s7 + $0x28] sm:$0xff]
        %v400 = vld [vmem:[%s7 + $0x30] sm:$0xff]
        %v401 = vld [vmem:[%s7 + $0x38] sm:$0xff]
        %402 = vadd.xlane.f32.xlu0 %v306
        %v403 = vpop.xlane.xlu0 %402
        %404 = vadd.xlane.f32.xlu0 %v307
        %v405 = vpop.xlane.xlu0 %404
        %406 = vadd.xlane.f32.xlu0 %v308
        %v407 = vpop.xlane.xlu0 %406
        %408 = vadd.xlane.f32.xlu0 %v309
        %v409 = vpop.xlane.xlu0 %408
        %410 = vadd.xlane.f32.xlu0 %v310
        %v411 = vpop.xlane.xlu0 %410
        %412 = vadd.xlane.f32.xlu0 %v311
        %v413 = vpop.xlane.xlu0 %412
        %414 = vadd.xlane.f32.xlu0 %v312
        %v415 = vpop.xlane.xlu0 %414
        %416 = vadd.xlane.f32.xlu0 %v313
        %v417 = vpop.xlane.xlu0 %416
        %vm418 = vcmask 523264
        %v420 = vsel %vm418, %v330, 0
        %v423 = vsel %vm418, %v331, 0
        %v426 = vsel %vm418, %v332, 0
        %v429 = vsel %vm418, %v333, 0
        %v432 = vsel %vm418, %v334, 0
        %v435 = vsel %vm418, %v335, 0
        %v438 = vsel %vm418, %v336, 0
        %v441 = vsel %vm418, %v337, 0
        %443 = vmatpush.msra.mxu0 0.0
        %444 = vmatpush.msra.mxu0 0.0
        %445 = vmatpush.msra.mxu0 0.0
        %446 = vmatpush.msra.mxu0 0.0
        %447 = vmatpush.msra.mxu0 0.0
        %448 = vmatpush.msra.mxu0 0.0
        %449 = vmatpush.msra.mxu0 0.0
        %450 = vmatpush.msra.mxu0 0.0
        %451 = vmatpush.msra.mxu0 %v417
        %452 = vmatpush.msra.mxu0 %v415
        %453 = vmatpush.msra.mxu0 %v413
        %454 = vmatpush.msra.mxu0 %v411
        %455 = vmatpush.msra.mxu0 %v409
        %456 = vmatpush.msra.mxu0 %v407
        %457 = vmatpush.msra.mxu0 %v405
        %458 = vmatpush.msra.mxu0 %v403
        %459 = vmatmul.f32.gmra.mxu0 %v420
        %v460 = vpop.f32.mrf.mxu0
        %v461 = vadd.f32 0.0, %v460
        %462 = vmatmul.f32.gmra.mxu0 %v423
        %v463 = vpop.f32.mrf.mxu0
        %v464 = vadd.f32 0.0, %v463
        %465 = vmatmul.f32.gmra.mxu0 %v426
        %v466 = vpop.f32.mrf.mxu0
        %v467 = vadd.f32 0.0, %v466
        %468 = vmatmul.f32.gmra.mxu0 %v429
        %v469 = vpop.f32.mrf.mxu0
        %v470 = vadd.f32 0.0, %v469
        %471 = vmatmul.f32.gmra.mxu0 %v432
        %v472 = vpop.f32.mrf.mxu0
        %v473 = vadd.f32 0.0, %v472
        %474 = vmatmul.f32.gmra.mxu0 %v435
        %v475 = vpop.f32.mrf.mxu0
        %v476 = vadd.f32 0.0, %v475
        %477 = vmatmul.f32.gmra.mxu0 %v438
        %v478 = vpop.f32.mrf.mxu0
        %v479 = vadd.f32 0.0, %v478
        %480 = vmatmul.f32.gmra.mxu0 %v441
        %v481 = vpop.f32.mrf.mxu0
        %v482 = vadd.f32 0.0, %v481
        %483 = vdwg.mxu0
        %485 = vset.pattern.permute.xlu0 0
        %486 = vperm.xlu0 %485, %v461
        %v487 = vpop.permute.xlu0 %486
        %490 = vset.pattern.permute.xlu0 0
        %491 = vperm.xlu0 %490, %v464
        %v492 = vpop.permute.xlu0 %491
        %495 = vset.pattern.permute.xlu0 0
        %496 = vperm.xlu0 %495, %v467
        %v497 = vpop.permute.xlu0 %496
        %500 = vset.pattern.permute.xlu0 0
        %501 = vperm.xlu0 %500, %v470
        %v502 = vpop.permute.xlu0 %501
        %505 = vset.pattern.permute.xlu0 0
        %506 = vperm.xlu0 %505, %v473
        %v507 = vpop.permute.xlu0 %506
        %510 = vset.pattern.permute.xlu0 0
        %511 = vperm.xlu0 %510, %v476
        %v512 = vpop.permute.xlu0 %511
        %515 = vset.pattern.permute.xlu0 0
        %516 = vperm.xlu0 %515, %v479
        %v517 = vpop.permute.xlu0 %516
        %520 = vset.pattern.permute.xlu0 0
        %521 = vperm.xlu0 %520, %v482
        %v522 = vpop.permute.xlu0 %521
        %v524 = vsub.f32 %v306, %v487
        %v525 = vsub.f32 %v307, %v492
        %v526 = vsub.f32 %v308, %v497
        %v527 = vsub.f32 %v309, %v502
        %v528 = vsub.f32 %v310, %v507
        %v529 = vsub.f32 %v311, %v512
        %v530 = vsub.f32 %v312, %v517
        %v531 = vsub.f32 %v313, %v522
        %v532 = vmul.f32 %v524, %v524
        %v533 = vmul.f32 %v525, %v525
        %v534 = vmul.f32 %v526, %v526
        %v535 = vmul.f32 %v527, %v527
        %v536 = vmul.f32 %v528, %v528
        %v537 = vmul.f32 %v529, %v529
        %v538 = vmul.f32 %v530, %v530
        %v539 = vmul.f32 %v531, %v531
        %540 = vadd.xlane.f32.xlu0 %v532
        %v541 = vpop.xlane.xlu0 %540
        %542 = vadd.xlane.f32.xlu0 %v533
        %v543 = vpop.xlane.xlu0 %542
        %544 = vadd.xlane.f32.xlu0 %v534
        %v545 = vpop.xlane.xlu0 %544
        %546 = vadd.xlane.f32.xlu0 %v535
        %v547 = vpop.xlane.xlu0 %546
        %548 = vadd.xlane.f32.xlu0 %v536
        %v549 = vpop.xlane.xlu0 %548
        %550 = vadd.xlane.f32.xlu0 %v537
        %v551 = vpop.xlane.xlu0 %550
        %552 = vadd.xlane.f32.xlu0 %v538
        %v553 = vpop.xlane.xlu0 %552
        %554 = vadd.xlane.f32.xlu0 %v539
        %v555 = vpop.xlane.xlu0 %554
        %556 = vmatpush.msra.mxu0 0.0
        %557 = vmatpush.msra.mxu0 0.0
        %558 = vmatpush.msra.mxu0 0.0
        %559 = vmatpush.msra.mxu0 0.0
        %560 = vmatpush.msra.mxu0 0.0
        %561 = vmatpush.msra.mxu0 0.0
        %562 = vmatpush.msra.mxu0 0.0
        %563 = vmatpush.msra.mxu0 0.0
        %564 = vmatpush.msra.mxu0 %v555
        %565 = vmatpush.msra.mxu0 %v553
        %566 = vmatpush.msra.mxu0 %v551
        %567 = vmatpush.msra.mxu0 %v549
        %568 = vmatpush.msra.mxu0 %v547
        %569 = vmatpush.msra.mxu0 %v545
        %570 = vmatpush.msra.mxu0 %v543
        %571 = vmatpush.msra.mxu0 %v541
        %572 = vmatmul.f32.gmra.mxu0 %v420
        %v573 = vpop.f32.mrf.mxu0
        %v574 = vadd.f32 1e-05, %v573
        %575 = vmatmul.f32.gmra.mxu0 %v423
        %v576 = vpop.f32.mrf.mxu0
        %v577 = vadd.f32 1e-05, %v576
        %578 = vmatmul.f32.gmra.mxu0 %v426
        %v579 = vpop.f32.mrf.mxu0
        %v580 = vadd.f32 1e-05, %v579
        %581 = vmatmul.f32.gmra.mxu0 %v429
        %v582 = vpop.f32.mrf.mxu0
        %v583 = vadd.f32 1e-05, %v582
        %584 = vmatmul.f32.gmra.mxu0 %v432
        %v585 = vpop.f32.mrf.mxu0
        %v586 = vadd.f32 1e-05, %v585
        %587 = vmatmul.f32.gmra.mxu0 %v435
        %v588 = vpop.f32.mrf.mxu0
        %v589 = vadd.f32 1e-05, %v588
        %590 = vmatmul.f32.gmra.mxu0 %v438
        %v591 = vpop.f32.mrf.mxu0
        %v592 = vadd.f32 1e-05, %v591
        %593 = vmatmul.f32.gmra.mxu0 %v441
        %v594 = vpop.f32.mrf.mxu0
        %v595 = vadd.f32 1e-05, %v594
        %596 = vdwg.mxu0
        %v597 = vrsqrt.pop %v574
        %v598 = vmul.f32 %v597, %v574
        %v599 = vmul.f32 %v598, %v597
        %v600 = vmul.f32 0.5, %v599
        %v601 = vsub.f32 1.5, %v600
        %v602 = vmul.f32 %v597, %v601
        %vm603 = vweird.f32 %v574
        %vm604 = vweird.f32 %v597
        %vm605 = vmor %vm603, %vm604
        %v606 = vsel %vm605, %v597, %v602
        %v607 = vrsqrt.pop %v577
        %v608 = vmul.f32 %v607, %v577
        %v609 = vmul.f32 %v608, %v607
        %v610 = vmul.f32 0.5, %v609
        %v611 = vsub.f32 1.5, %v610
        %v612 = vmul.f32 %v607, %v611
        %vm613 = vweird.f32 %v577
        %vm614 = vweird.f32 %v607
        %vm615 = vmor %vm613, %vm614
        %v616 = vsel %vm615, %v607, %v612
        %v617 = vrsqrt.pop %v580
        %v618 = vmul.f32 %v617, %v580
        %v619 = vmul.f32 %v618, %v617
        %v620 = vmul.f32 0.5, %v619
        %v621 = vsub.f32 1.5, %v620
        %v622 = vmul.f32 %v617, %v621
        %vm623 = vweird.f32 %v580
        %vm624 = vweird.f32 %v617
        %vm625 = vmor %vm623, %vm624
        %v626 = vsel %vm625, %v617, %v622
        %v627 = vrsqrt.pop %v583
        %v628 = vmul.f32 %v627, %v583
        %v629 = vmul.f32 %v628, %v627
        %v630 = vmul.f32 0.5, %v629
        %v631 = vsub.f32 1.5, %v630
        %v632 = vmul.f32 %v627, %v631
        %vm633 = vweird.f32 %v583
        %vm634 = vweird.f32 %v627
        %vm635 = vmor %vm633, %vm634
        %v636 = vsel %vm635, %v627, %v632
        %v637 = vrsqrt.pop %v586
        %v638 = vmul.f32 %v637, %v586
        %v639 = vmul.f32 %v638, %v637
        %v640 = vmul.f32 0.5, %v639
        %v641 = vsub.f32 1.5, %v640
        %v642 = vmul.f32 %v637, %v641
        %vm643 = vweird.f32 %v586
        %vm644 = vweird.f32 %v637
        %vm645 = vmor %vm643, %vm644
        %v646 = vsel %vm645, %v637, %v642
        %v647 = vrsqrt.pop %v589
        %v648 = vmul.f32 %v647, %v589
        %v649 = vmul.f32 %v648, %v647
        %v650 = vmul.f32 0.5, %v649
        %v651 = vsub.f32 1.5, %v650
        %v652 = vmul.f32 %v647, %v651
        %vm653 = vweird.f32 %v589
        %vm654 = vweird.f32 %v647
        %vm655 = vmor %vm653, %vm654
        %v656 = vsel %vm655, %v647, %v652
        %v657 = vrsqrt.pop %v592
        %v658 = vmul.f32 %v657, %v592
        %v659 = vmul.f32 %v658, %v657
        %v660 = vmul.f32 0.5, %v659
        %v661 = vsub.f32 1.5, %v660
        %v662 = vmul.f32 %v657, %v661
        %vm663 = vweird.f32 %v592
        %vm664 = vweird.f32 %v657
        %vm665 = vmor %vm663, %vm664
        %v666 = vsel %vm665, %v657, %v662
        %v667 = vrsqrt.pop %v595
        %v668 = vmul.f32 %v667, %v595
        %v669 = vmul.f32 %v668, %v667
        %v670 = vmul.f32 0.5, %v669
        %v671 = vsub.f32 1.5, %v670
        %v672 = vmul.f32 %v667, %v671
        %vm673 = vweird.f32 %v595
        %vm674 = vweird.f32 %v667
        %vm675 = vmor %vm673, %vm674
        %v676 = vsel %vm675, %v667, %v672
        %678 = vset.pattern.permute.xlu0 0
        %679 = vperm.xlu0 %678, %v606
        %v680 = vpop.permute.xlu0 %679
        %683 = vset.pattern.permute.xlu0 0
        %684 = vperm.xlu0 %683, %v616
        %v685 = vpop.permute.xlu0 %684
        %688 = vset.pattern.permute.xlu0 0
        %689 = vperm.xlu0 %688, %v626
        %v690 = vpop.permute.xlu0 %689
        %693 = vset.pattern.permute.xlu0 0
        %694 = vperm.xlu0 %693, %v636
        %v695 = vpop.permute.xlu0 %694
        %698 = vset.pattern.permute.xlu0 0
        %699 = vperm.xlu0 %698, %v646
        %v700 = vpop.permute.xlu0 %699
        %703 = vset.pattern.permute.xlu0 0
        %704 = vperm.xlu0 %703, %v656
        %v705 = vpop.permute.xlu0 %704
        %708 = vset.pattern.permute.xlu0 0
        %709 = vperm.xlu0 %708, %v666
        %v710 = vpop.permute.xlu0 %709
        %713 = vset.pattern.permute.xlu0 0
        %714 = vperm.xlu0 %713, %v676
        %v715 = vpop.permute.xlu0 %714
        %v717 = vmul.f32 %v524, %v680
        %v718 = vmul.f32 %v525, %v685
        %v719 = vmul.f32 %v526, %v690
        %v720 = vmul.f32 %v527, %v695
        %v721 = vmul.f32 %v528, %v700
        %v722 = vmul.f32 %v529, %v705
        %v723 = vmul.f32 %v530, %v710
        %v724 = vmul.f32 %v531, %v715
        %726 = vset.pattern.permute.xlu0 0
        %727 = vperm.xlu0 %726, %v314
        %v728 = vpop.permute.xlu0 %727
        %731 = vset.pattern.permute.xlu0 0
        %732 = vperm.xlu0 %731, %v315
        %v733 = vpop.permute.xlu0 %732
        %736 = vset.pattern.permute.xlu0 0
        %737 = vperm.xlu0 %736, %v316
        %v738 = vpop.permute.xlu0 %737
        %741 = vset.pattern.permute.xlu0 0
        %742 = vperm.xlu0 %741, %v317
        %v743 = vpop.permute.xlu0 %742
        %746 = vset.pattern.permute.xlu0 0
        %747 = vperm.xlu0 %746, %v318
        %v748 = vpop.permute.xlu0 %747
        %751 = vset.pattern.permute.xlu0 0
        %752 = vperm.xlu0 %751, %v319
        %v753 = vpop.permute.xlu0 %752
        %756 = vset.pattern.permute.xlu0 0
        %757 = vperm.xlu0 %756, %v320
        %v758 = vpop.permute.xlu0 %757
        %761 = vset.pattern.permute.xlu0 0
        %762 = vperm.xlu0 %761, %v321
        %v763 = vpop.permute.xlu0 %762
        %v765 = vmul.f32 %v717, %v728
        %v766 = vmul.f32 %v718, %v733
        %v767 = vmul.f32 %v719, %v738
        %v768 = vmul.f32 %v720, %v743
        %v769 = vmul.f32 %v721, %v748
        %v770 = vmul.f32 %v722, %v753
        %v771 = vmul.f32 %v723, %v758
        %v772 = vmul.f32 %v724, %v763
        %774 = vset.pattern.permute.xlu0 0
        %775 = vperm.xlu0 %774, %v322
        %v776 = vpop.permute.xlu0 %775
        %779 = vset.pattern.permute.xlu0 0
        %780 = vperm.xlu0 %779, %v323
        %v781 = vpop.permute.xlu0 %780
        %784 = vset.pattern.permute.xlu0 0
        %785 = vperm.xlu0 %784, %v324
        %v786 = vpop.permute.xlu0 %785
        %789 = vset.pattern.permute.xlu0 0
        %790 = vperm.xlu0 %789, %v325
        %v791 = vpop.permute.xlu0 %790
        %794 = vset.pattern.permute.xlu0 0
        %795 = vperm.xlu0 %794, %v326
        %v796 = vpop.permute.xlu0 %795
        %799 = vset.pattern.permute.xlu0 0
        %800 = vperm.xlu0 %799, %v327
        %v801 = vpop.permute.xlu0 %800
        %804 = vset.pattern.permute.xlu0 0
        %805 = vperm.xlu0 %804, %v328
        %v806 = vpop.permute.xlu0 %805
        %809 = vset.pattern.permute.xlu0 0
        %810 = vperm.xlu0 %809, %v329
        %v811 = vpop.permute.xlu0 %810
        %v813 = vadd.f32 %v765, %v776
        %v814 = vadd.f32 %v766, %v781
        %v815 = vadd.f32 %v767, %v786
        %v816 = vadd.f32 %v768, %v791
        %v817 = vadd.f32 %v769, %v796
        %v818 = vadd.f32 %v770, %v801
        %v819 = vadd.f32 %v771, %v806
        %v820 = vadd.f32 %v772, %v811
        %v821 = vpack.c.bf16 %v814, %v813
        %v822 = vpack.c.bf16 %v816, %v815
        %v823 = vpack.c.bf16 %v818, %v817
        %v824 = vpack.c.bf16 %v820, %v819
        %826 = vset.pattern.permute.xlu0 0
        %827 = vperm.xlu0 %826, %v362
        %v828 = vpop.permute.xlu0 %827
        %831 = vset.pattern.permute.xlu0 0
        %832 = vperm.xlu0 %831, %v363
        %v833 = vpop.permute.xlu0 %832
        %836 = vset.pattern.permute.xlu0 0
        %837 = vperm.xlu0 %836, %v364
        %v838 = vpop.permute.xlu0 %837
        %841 = vset.pattern.permute.xlu0 0
        %842 = vperm.xlu0 %841, %v365
        %v843 = vpop.permute.xlu0 %842
        %846 = vset.pattern.permute.xlu0 0
        %847 = vperm.xlu0 %846, %v366
        %v848 = vpop.permute.xlu0 %847
        %851 = vset.pattern.permute.xlu0 0
        %852 = vperm.xlu0 %851, %v367
        %v853 = vpop.permute.xlu0 %852
        %856 = vset.pattern.permute.xlu0 0
        %857 = vperm.xlu0 %856, %v368
        %v858 = vpop.permute.xlu0 %857
        %861 = vset.pattern.permute.xlu0 0
        %862 = vperm.xlu0 %861, %v369
        %v863 = vpop.permute.xlu0 %862
        %866 = vset.pattern.permute.xlu0 0
        %867 = vperm.xlu0 %866, %v370
        %v868 = vpop.permute.xlu0 %867
        %871 = vset.pattern.permute.xlu0 0
        %872 = vperm.xlu0 %871, %v371
        %v873 = vpop.permute.xlu0 %872
        %876 = vset.pattern.permute.xlu0 0
        %877 = vperm.xlu0 %876, %v372
        %v878 = vpop.permute.xlu0 %877
        %881 = vset.pattern.permute.xlu0 0
        %882 = vperm.xlu0 %881, %v373
        %v883 = vpop.permute.xlu0 %882
        %886 = vset.pattern.permute.xlu0 0
        %887 = vperm.xlu0 %886, %v374
        %v888 = vpop.permute.xlu0 %887
        %891 = vset.pattern.permute.xlu0 0
        %892 = vperm.xlu0 %891, %v375
        %v893 = vpop.permute.xlu0 %892
        %896 = vset.pattern.permute.xlu0 0
        %897 = vperm.xlu0 %896, %v376
        %v898 = vpop.permute.xlu0 %897
        %901 = vset.pattern.permute.xlu0 0
        %902 = vperm.xlu0 %901, %v377
        %v903 = vpop.permute.xlu0 %902
        %906 = vset.pattern.permute.xlu0 0
        %907 = vperm.xlu0 %906, %v378
        %v908 = vpop.permute.xlu0 %907
        %911 = vset.pattern.permute.xlu0 0
        %912 = vperm.xlu0 %911, %v379
        %v913 = vpop.permute.xlu0 %912
        %916 = vset.pattern.permute.xlu0 0
        %917 = vperm.xlu0 %916, %v380
        %v918 = vpop.permute.xlu0 %917
        %921 = vset.pattern.permute.xlu0 0
        %922 = vperm.xlu0 %921, %v381
        %v923 = vpop.permute.xlu0 %922
        %926 = vset.pattern.permute.xlu0 0
        %927 = vperm.xlu0 %926, %v382
        %v928 = vpop.permute.xlu0 %927
        %931 = vset.pattern.permute.xlu0 0
        %932 = vperm.xlu0 %931, %v383
        %v933 = vpop.permute.xlu0 %932
        %936 = vset.pattern.permute.xlu0 0
        %937 = vperm.xlu0 %936, %v384
        %v938 = vpop.permute.xlu0 %937
        %941 = vset.pattern.permute.xlu0 0
        %942 = vperm.xlu0 %941, %v385
        %v943 = vpop.permute.xlu0 %942
        %v969 = vunpack.c.l.b16 %v338
        %v970 = vunpack.c.l.b16 %v339
        %v971 = vunpack.c.l.b16 %v340
        %v972 = vunpack.c.l.b16 %v341
        %v973 = vunpack.c.l.b16 %v342
        %v974 = vunpack.c.l.b16 %v343
        %v975 = vunpack.c.l.b16 %v344
        %v976 = vunpack.c.l.b16 %v345
        %v977 = vunpack.c.l.b16 %v346
        %v978 = vunpack.c.l.b16 %v347
        %v979 = vunpack.c.l.b16 %v348
        %v980 = vunpack.c.l.b16 %v349
        %v981 = vunpack.c.l.b16 %v350
        %v982 = vunpack.c.l.b16 %v351
        %v983 = vunpack.c.l.b16 %v352
        %v984 = vunpack.c.l.b16 %v353
        %v985 = vunpack.c.l.b16 %v354
        %v986 = vunpack.c.l.b16 %v355
        %v987 = vunpack.c.l.b16 %v356
        %v988 = vunpack.c.l.b16 %v357
        %v989 = vunpack.c.l.b16 %v358
        %v990 = vunpack.c.l.b16 %v359
        %v991 = vunpack.c.l.b16 %v360
        %v992 = vunpack.c.l.b16 %v361
        %v993 = vpack.c.b16 %v970, %v969
        %v994 = vpack.c.b16 %v972, %v971
        %v995 = vpack.c.b16 %v974, %v973
        %v996 = vpack.c.b16 %v976, %v975
        %v997 = vpack.c.b16 %v978, %v977
        %v998 = vpack.c.b16 %v980, %v979
        %v999 = vpack.c.b16 %v982, %v981
        %v1000 = vpack.c.b16 %v984, %v983
        %v1001 = vpack.c.b16 %v986, %v985
        %v1002 = vpack.c.b16 %v988, %v987
        %v1003 = vpack.c.b16 %v990, %v989
        %v1004 = vpack.c.b16 %v992, %v991
        %v1006 = vsel %vm418, %v993, 0
        %v1009 = vsel %vm418, %v994, 0
        %v1012 = vsel %vm418, %v995, 0
        %v1015 = vsel %vm418, %v996, 0
        %v1018 = vsel %vm418, %v997, 0
        %v1021 = vsel %vm418, %v998, 0
        %v1024 = vsel %vm418, %v999, 0
        %v1027 = vsel %vm418, %v1000, 0
        %v1030 = vsel %vm418, %v1001, 0
        %v1033 = vsel %vm418, %v1002, 0
        %v1036 = vsel %vm418, %v1003, 0
        %v1039 = vsel %vm418, %v1004, 0
        %1041 = vmatpush.bf16.msra.mxu0 0
        %1042 = vmatpush.bf16.msra.mxu0 0
        %1043 = vmatpush.bf16.msra.mxu0 0
        %1044 = vmatpush.bf16.msra.mxu0 0
        %1045 = vmatpush.bf16.msra.mxu0 %v824
        %1046 = vmatpush.bf16.msra.mxu0 %v823
        %1047 = vmatpush.bf16.msra.mxu0 %v822
        %1048 = vmatpush.bf16.msra.mxu0 %v821
        %1049 = vmatmul.bf16.gmra.mxu0 %v1006
        %v1050 = vpop.f32.mrf.mxu0
        %v1051 = vadd.f32 %v828, %v1050
        %v1052 = vpop.f32.mrf.mxu0
        %v1053 = vadd.f32 %v833, %v1052
        %1054 = vmatmul.bf16.gmra.mxu0 %v1009
        %v1055 = vpop.f32.mrf.mxu0
        %v1056 = vadd.f32 %v838, %v1055
        %v1057 = vpop.f32.mrf.mxu0
        %v1058 = vadd.f32 %v843, %v1057
        %1059 = vmatmul.bf16.gmra.mxu0 %v1012
        %v1060 = vpop.f32.mrf.mxu0
        %v1061 = vadd.f32 %v848, %v1060
        %v1062 = vpop.f32.mrf.mxu0
        %v1063 = vadd.f32 %v853, %v1062
        %1064 = vmatmul.bf16.gmra.mxu0 %v1015
        %v1065 = vpop.f32.mrf.mxu0
        %v1066 = vadd.f32 %v858, %v1065
        %v1067 = vpop.f32.mrf.mxu0
        %v1068 = vadd.f32 %v863, %v1067
        %1069 = vmatmul.bf16.gmra.mxu0 %v1018
        %v1070 = vpop.f32.mrf.mxu0
        %v1071 = vadd.f32 %v868, %v1070
        %v1072 = vpop.f32.mrf.mxu0
        %v1073 = vadd.f32 %v873, %v1072
        %1074 = vmatmul.bf16.gmra.mxu0 %v1021
        %v1075 = vpop.f32.mrf.mxu0
        %v1076 = vadd.f32 %v878, %v1075
        %v1077 = vpop.f32.mrf.mxu0
        %v1078 = vadd.f32 %v883, %v1077
        %1079 = vmatmul.bf16.gmra.mxu0 %v1024
        %v1080 = vpop.f32.mrf.mxu0
        %v1081 = vadd.f32 %v888, %v1080
        %v1082 = vpop.f32.mrf.mxu0
        %v1083 = vadd.f32 %v893, %v1082
        %1084 = vmatmul.bf16.gmra.mxu0 %v1027
        %v1085 = vpop.f32.mrf.mxu0
        %v1086 = vadd.f32 %v898, %v1085
        %v1087 = vpop.f32.mrf.mxu0
        %v1088 = vadd.f32 %v903, %v1087
        %1089 = vmatmul.bf16.gmra.mxu0 %v1030
        %v1090 = vpop.f32.mrf.mxu0
        %v1091 = vadd.f32 %v908, %v1090
        %v1092 = vpop.f32.mrf.mxu0
        %v1093 = vadd.f32 %v913, %v1092
        %1094 = vmatmul.bf16.gmra.mxu0 %v1033
        %v1095 = vpop.f32.mrf.mxu0
        %v1096 = vadd.f32 %v918, %v1095
        %v1097 = vpop.f32.mrf.mxu0
        %v1098 = vadd.f32 %v923, %v1097
        %1099 = vmatmul.bf16.gmra.mxu0 %v1036
        %v1100 = vpop.f32.mrf.mxu0
        %v1101 = vadd.f32 %v928, %v1100
        %v1102 = vpop.f32.mrf.mxu0
        %v1103 = vadd.f32 %v933, %v1102
        %1104 = vmatmul.bf16.gmra.mxu0 %v1039
        %v1105 = vpop.f32.mrf.mxu0
        %v1106 = vadd.f32 %v938, %v1105
        %v1107 = vpop.f32.mrf.mxu0
        %v1108 = vadd.f32 %v943, %v1107
        %1109 = vdwg.mxu0
        %v1110 = vpack.c.bf16 %v1051, %v1051
        %v1111 = vpack.c.bf16 %v1053, %v1053
        %v1112 = vpack.c.bf16 %v1056, %v1056
        %v1113 = vpack.c.bf16 %v1058, %v1058
        %v1114 = vpack.c.bf16 %v1061, %v1061
        %v1115 = vpack.c.bf16 %v1063, %v1063
        %v1116 = vpack.c.bf16 %v1066, %v1066
        %v1117 = vpack.c.bf16 %v1068, %v1068
        %v1118 = vpack.c.bf16 %v1071, %v1071
        %v1119 = vpack.c.bf16 %v1073, %v1073
        %v1120 = vpack.c.bf16 %v1076, %v1076
        %v1121 = vpack.c.bf16 %v1078, %v1078
        %v1122 = vpack.c.bf16 %v1081, %v1081
        %v1123 = vpack.c.bf16 %v1083, %v1083
        %v1124 = vpack.c.bf16 %v1086, %v1086
        %v1125 = vpack.c.bf16 %v1088, %v1088
        %v1126 = vpack.c.bf16 %v1091, %v1091
        %v1127 = vpack.c.bf16 %v1093, %v1093
        %v1128 = vpack.c.bf16 %v1096, %v1096
        %v1129 = vpack.c.bf16 %v1098, %v1098
        %v1130 = vpack.c.bf16 %v1101, %v1101
        %v1131 = vpack.c.bf16 %v1103, %v1103
        %v1132 = vpack.c.bf16 %v1106, %v1106
        %v1133 = vpack.c.bf16 %v1108, %v1108
        %v1136 = vunpack.c.l.b16 %v1110
        %v1137 = vunpack.c.l.b16 %v1111
        %v1138 = vpack.c.b16 %v1137, %v1136
        %1140 = vxpose.xlu0.c.b16.start [1/8] %v1138, 128
        %1141 = vxpose.xlu0.c.b16.cont [2/8] 0, 128
        %1142 = vxpose.xlu0.c.b16.cont [3/8] 0, 128
        %1143 = vxpose.xlu0.c.b16.cont [4/8] 0, 128
        %1144 = vxpose.xlu0.c.b16.cont [5/8] 0, 128
        %1145 = vxpose.xlu0.c.b16.cont [6/8] 0, 128
        %1146 = vxpose.xlu0.c.b16.cont [7/8] 0, 128
        %1147 = vxpose.xlu0.c.b16.end [8/8] 0, 128
        %v1148 = vpop.trf.xlu0
        %v1149 = vpop.trf.xlu0
        %v1150 = vpop.trf.xlu0
        %v1151 = vpop.trf.xlu0
        %v1152 = vpop.trf.xlu0
        %v1153 = vpop.trf.xlu0
        %v1154 = vpop.trf.xlu0
        %v1155 = vpop.trf.xlu0
        %v1158 = vunpack.c.l.b16 %v1118
        %v1159 = vunpack.c.l.b16 %v1119
        %v1160 = vpack.c.b16 %v1159, %v1158
        %vm1162 = vcmask 130048
        %v1164 = vsel %vm1162, %v1148, 0
        %v1167 = vsel %vm1162, %v1149, 0
        %v1170 = vsel %vm1162, %v1150, 0
        %v1173 = vsel %vm1162, %v1151, 0
        %v1176 = vsel %vm1162, %v1152, 0
        %v1179 = vsel %vm1162, %v1153, 0
        %v1182 = vsel %vm1162, %v1154, 0
        %v1185 = vsel %vm1162, %v1155, 0
        %1187 = vmatpush.bf16.msra.mxu0 0
        %1188 = vmatpush.bf16.msra.mxu0 0
        %1189 = vmatpush.bf16.msra.mxu0 0
        %1190 = vmatpush.bf16.msra.mxu0 0
        %1191 = vmatpush.bf16.msra.mxu0 0
        %1192 = vmatpush.bf16.msra.mxu0 0
        %1193 = vmatpush.bf16.msra.mxu0 0
        %1194 = vmatpush.bf16.msra.mxu0 %v1160
        %1195 = vmatmul.bf16.gmra.mxu0 %v1164
        %v1196 = vpop.f32.mrf.mxu0
        %v1197 = vadd.f32 0.0, %v1196
        %v1198 = vpop.f32.mrf.mxu0
        %v1199 = vadd.f32 0.0, %v1198
        %1200 = vmatmul.bf16.gmra.mxu0 %v1167
        %v1201 = vpop.f32.mrf.mxu0
        %v1202 = vadd.f32 0.0, %v1201
        %v1203 = vpop.f32.mrf.mxu0
        %v1204 = vadd.f32 0.0, %v1203
        %1205 = vmatmul.bf16.gmra.mxu0 %v1170
        %v1206 = vpop.f32.mrf.mxu0
        %v1207 = vadd.f32 0.0, %v1206
        %v1208 = vpop.f32.mrf.mxu0
        %v1209 = vadd.f32 0.0, %v1208
        %1210 = vmatmul.bf16.gmra.mxu0 %v1173
        %v1211 = vpop.f32.mrf.mxu0
        %v1212 = vadd.f32 0.0, %v1211
        %v1213 = vpop.f32.mrf.mxu0
        %v1214 = vadd.f32 0.0, %v1213
        %1215 = vmatmul.bf16.gmra.mxu0 %v1176
        %v1216 = vpop.f32.mrf.mxu0
        %v1217 = vadd.f32 0.0, %v1216
        %v1218 = vpop.f32.mrf.mxu0
        %v1219 = vadd.f32 0.0, %v1218
        %1220 = vmatmul.bf16.gmra.mxu0 %v1179
        %v1221 = vpop.f32.mrf.mxu0
        %v1222 = vadd.f32 0.0, %v1221
        %v1223 = vpop.f32.mrf.mxu0
        %v1224 = vadd.f32 0.0, %v1223
        %1225 = vmatmul.bf16.gmra.mxu0 %v1182
        %v1226 = vpop.f32.mrf.mxu0
        %v1227 = vadd.f32 0.0, %v1226
        %v1228 = vpop.f32.mrf.mxu0
        %v1229 = vadd.f32 0.0, %v1228
        %1230 = vmatmul.bf16.gmra.mxu0 %v1185
        %v1231 = vpop.f32.mrf.mxu0
        %v1232 = vadd.f32 0.0, %v1231
        %v1233 = vpop.f32.mrf.mxu0
        %v1234 = vadd.f32 0.0, %v1233
        %1235 = vdwg.mxu0
        %v1238 = vunpack.c.l.b16 %v1112
        %v1239 = vunpack.c.l.b16 %v1113
        %v1240 = vpack.c.b16 %v1239, %v1238
        %1242 = vxpose.xlu0.c.b16.start [1/8] %v1240, 128
        %1243 = vxpose.xlu0.c.b16.cont [2/8] 0, 128
        %1244 = vxpose.xlu0.c.b16.cont [3/8] 0, 128
        %1245 = vxpose.xlu0.c.b16.cont [4/8] 0, 128
        %1246 = vxpose.xlu0.c.b16.cont [5/8] 0, 128
        %1247 = vxpose.xlu0.c.b16.cont [6/8] 0, 128
        %1248 = vxpose.xlu0.c.b16.cont [7/8] 0, 128
        %1249 = vxpose.xlu0.c.b16.end [8/8] 0, 128
        %v1250 = vpop.trf.xlu0
        %v1251 = vpop.trf.xlu0
        %v1252 = vpop.trf.xlu0
        %v1253 = vpop.trf.xlu0
        %v1254 = vpop.trf.xlu0
        %v1255 = vpop.trf.xlu0
        %v1256 = vpop.trf.xlu0
        %v1257 = vpop.trf.xlu0
        %v1260 = vunpack.c.l.b16 %v1120
        %v1261 = vunpack.c.l.b16 %v1121
        %v1262 = vpack.c.b16 %v1261, %v1260
        %v1265 = vsel %vm1162, %v1250, 0
        %v1268 = vsel %vm1162, %v1251, 0
        %v1271 = vsel %vm1162, %v1252, 0
        %v1274 = vsel %vm1162, %v1253, 0
        %v1277 = vsel %vm1162, %v1254, 0
        %v1280 = vsel %vm1162, %v1255, 0
        %v1283 = vsel %vm1162, %v1256, 0
        %v1286 = vsel %vm1162, %v1257, 0
        %1288 = vmatpush.bf16.msra.mxu0 0
        %1289 = vmatpush.bf16.msra.mxu0 0
        %1290 = vmatpush.bf16.msra.mxu0 0
        %1291 = vmatpush.bf16.msra.mxu0 0
        %1292 = vmatpush.bf16.msra.mxu0 0
        %1293 = vmatpush.bf16.msra.mxu0 0
        %1294 = vmatpush.bf16.msra.mxu0 0
        %1295 = vmatpush.bf16.msra.mxu0 %v1262
        %1296 = vmatmul.bf16.gmra.mxu0 %v1265
        %v1297 = vpop.f32.mrf.mxu0
        %v1298 = vadd.f32 0.0, %v1297
        %v1299 = vpop.f32.mrf.mxu0
        %v1300 = vadd.f32 0.0, %v1299
        %1301 = vmatmul.bf16.gmra.mxu0 %v1268
        %v1302 = vpop.f32.mrf.mxu0
        %v1303 = vadd.f32 0.0, %v1302
        %v1304 = vpop.f32.mrf.mxu0
        %v1305 = vadd.f32 0.0, %v1304
        %1306 = vmatmul.bf16.gmra.mxu0 %v1271
        %v1307 = vpop.f32.mrf.mxu0
        %v1308 = vadd.f32 0.0, %v1307
        %v1309 = vpop.f32.mrf.mxu0
        %v1310 = vadd.f32 0.0, %v1309
        %1311 = vmatmul.bf16.gmra.mxu0 %v1274
        %v1312 = vpop.f32.mrf.mxu0
        %v1313 = vadd.f32 0.0, %v1312
        %v1314 = vpop.f32.mrf.mxu0
        %v1315 = vadd.f32 0.0, %v1314
        %1316 = vmatmul.bf16.gmra.mxu0 %v1277
        %v1317 = vpop.f32.mrf.mxu0
        %v1318 = vadd.f32 0.0, %v1317
        %v1319 = vpop.f32.mrf.mxu0
        %v1320 = vadd.f32 0.0, %v1319
        %1321 = vmatmul.bf16.gmra.mxu0 %v1280
        %v1322 = vpop.f32.mrf.mxu0
        %v1323 = vadd.f32 0.0, %v1322
        %v1324 = vpop.f32.mrf.mxu0
        %v1325 = vadd.f32 0.0, %v1324
        %1326 = vmatmul.bf16.gmra.mxu0 %v1283
        %v1327 = vpop.f32.mrf.mxu0
        %v1328 = vadd.f32 0.0, %v1327
        %v1329 = vpop.f32.mrf.mxu0
        %v1330 = vadd.f32 0.0, %v1329
        %1331 = vmatmul.bf16.gmra.mxu0 %v1286
        %v1332 = vpop.f32.mrf.mxu0
        %v1333 = vadd.f32 0.0, %v1332
        %v1334 = vpop.f32.mrf.mxu0
        %v1335 = vadd.f32 0.0, %v1334
        %1336 = vdwg.mxu0
        %v1339 = vunpack.c.l.b16 %v1114
        %v1340 = vunpack.c.l.b16 %v1115
        %v1341 = vpack.c.b16 %v1340, %v1339
        %1343 = vxpose.xlu0.c.b16.start [1/8] %v1341, 128
        %1344 = vxpose.xlu0.c.b16.cont [2/8] 0, 128
        %1345 = vxpose.xlu0.c.b16.cont [3/8] 0, 128
        %1346 = vxpose.xlu0.c.b16.cont [4/8] 0, 128
        %1347 = vxpose.xlu0.c.b16.cont [5/8] 0, 128
        %1348 = vxpose.xlu0.c.b16.cont [6/8] 0, 128
        %1349 = vxpose.xlu0.c.b16.cont [7/8] 0, 128
        %1350 = vxpose.xlu0.c.b16.end [8/8] 0, 128
        %v1351 = vpop.trf.xlu0
        %v1352 = vpop.trf.xlu0
        %v1353 = vpop.trf.xlu0
        %v1354 = vpop.trf.xlu0
        %v1355 = vpop.trf.xlu0
        %v1356 = vpop.trf.xlu0
        %v1357 = vpop.trf.xlu0
        %v1358 = vpop.trf.xlu0
        %v1361 = vunpack.c.l.b16 %v1122
        %v1362 = vunpack.c.l.b16 %v1123
        %v1363 = vpack.c.b16 %v1362, %v1361
        %v1366 = vsel %vm1162, %v1351, 0
        %v1369 = vsel %vm1162, %v1352, 0
        %v1372 = vsel %vm1162, %v1353, 0
        %v1375 = vsel %vm1162, %v1354, 0
        %v1378 = vsel %vm1162, %v1355, 0
        %v1381 = vsel %vm1162, %v1356, 0
        %v1384 = vsel %vm1162, %v1357, 0
        %v1387 = vsel %vm1162, %v1358, 0
        %1389 = vmatpush.bf16.msra.mxu0 0
        %1390 = vmatpush.bf16.msra.mxu0 0
        %1391 = vmatpush.bf16.msra.mxu0 0
        %1392 = vmatpush.bf16.msra.mxu0 0
        %1393 = vmatpush.bf16.msra.mxu0 0
        %1394 = vmatpush.bf16.msra.mxu0 0
        %1395 = vmatpush.bf16.msra.mxu0 0
        %1396 = vmatpush.bf16.msra.mxu0 %v1363
        %1397 = vmatmul.bf16.gmra.mxu0 %v1366
        %v1398 = vpop.f32.mrf.mxu0
        %v1399 = vadd.f32 0.0, %v1398
        %v1400 = vpop.f32.mrf.mxu0
        %v1401 = vadd.f32 0.0, %v1400
        %1402 = vmatmul.bf16.gmra.mxu0 %v1369
        %v1403 = vpop.f32.mrf.mxu0
        %v1404 = vadd.f32 0.0, %v1403
        %v1405 = vpop.f32.mrf.mxu0
        %v1406 = vadd.f32 0.0, %v1405
        %1407 = vmatmul.bf16.gmra.mxu0 %v1372
        %v1408 = vpop.f32.mrf.mxu0
        %v1409 = vadd.f32 0.0, %v1408
        %v1410 = vpop.f32.mrf.mxu0
        %v1411 = vadd.f32 0.0, %v1410
        %1412 = vmatmul.bf16.gmra.mxu0 %v1375
        %v1413 = vpop.f32.mrf.mxu0
        %v1414 = vadd.f32 0.0, %v1413
        %v1415 = vpop.f32.mrf.mxu0
        %v1416 = vadd.f32 0.0, %v1415
        %1417 = vmatmul.bf16.gmra.mxu0 %v1378
        %v1418 = vpop.f32.mrf.mxu0
        %v1419 = vadd.f32 0.0, %v1418
        %v1420 = vpop.f32.mrf.mxu0
        %v1421 = vadd.f32 0.0, %v1420
        %1422 = vmatmul.bf16.gmra.mxu0 %v1381
        %v1423 = vpop.f32.mrf.mxu0
        %v1424 = vadd.f32 0.0, %v1423
        %v1425 = vpop.f32.mrf.mxu0
        %v1426 = vadd.f32 0.0, %v1425
        %1427 = vmatmul.bf16.gmra.mxu0 %v1384
        %v1428 = vpop.f32.mrf.mxu0
        %v1429 = vadd.f32 0.0, %v1428
        %v1430 = vpop.f32.mrf.mxu0
        %v1431 = vadd.f32 0.0, %v1430
        %1432 = vmatmul.bf16.gmra.mxu0 %v1387
        %v1433 = vpop.f32.mrf.mxu0
        %v1434 = vadd.f32 0.0, %v1433
        %v1435 = vpop.f32.mrf.mxu0
        %v1436 = vadd.f32 0.0, %v1435
        %1437 = vdwg.mxu0
        %v1440 = vunpack.c.l.b16 %v1116
        %v1441 = vunpack.c.l.b16 %v1117
        %v1442 = vpack.c.b16 %v1441, %v1440
        %1444 = vxpose.xlu0.c.b16.start [1/8] %v1442, 128
        %1445 = vxpose.xlu0.c.b16.cont [2/8] 0, 128
        %1446 = vxpose.xlu0.c.b16.cont [3/8] 0, 128
        %1447 = vxpose.xlu0.c.b16.cont [4/8] 0, 128
        %1448 = vxpose.xlu0.c.b16.cont [5/8] 0, 128
        %1449 = vxpose.xlu0.c.b16.cont [6/8] 0, 128
        %1450 = vxpose.xlu0.c.b16.cont [7/8] 0, 128
        %1451 = vxpose.xlu0.c.b16.end [8/8] 0, 128
        %v1452 = vpop.trf.xlu0
        %v1453 = vpop.trf.xlu0
        %v1454 = vpop.trf.xlu0
        %v1455 = vpop.trf.xlu0
        %v1456 = vpop.trf.xlu0
        %v1457 = vpop.trf.xlu0
        %v1458 = vpop.trf.xlu0
        %v1459 = vpop.trf.xlu0
        %v1462 = vunpack.c.l.b16 %v1124
        %v1463 = vunpack.c.l.b16 %v1125
        %v1464 = vpack.c.b16 %v1463, %v1462
        %v1467 = vsel %vm1162, %v1452, 0
        %v1470 = vsel %vm1162, %v1453, 0
        %v1473 = vsel %vm1162, %v1454, 0
        %v1476 = vsel %vm1162, %v1455, 0
        %v1479 = vsel %vm1162, %v1456, 0
        %v1482 = vsel %vm1162, %v1457, 0
        %v1485 = vsel %vm1162, %v1458, 0
        %v1488 = vsel %vm1162, %v1459, 0
        %1490 = vmatpush.bf16.msra.mxu0 0
        %1491 = vmatpush.bf16.msra.mxu0 0
        %1492 = vmatpush.bf16.msra.mxu0 0
        %1493 = vmatpush.bf16.msra.mxu0 0
        %1494 = vmatpush.bf16.msra.mxu0 0
        %1495 = vmatpush.bf16.msra.mxu0 0
        %1496 = vmatpush.bf16.msra.mxu0 0
        %1497 = vmatpush.bf16.msra.mxu0 %v1464
        %1498 = vmatmul.bf16.gmra.mxu0 %v1467
        %v1499 = vpop.f32.mrf.mxu0
        %v1500 = vadd.f32 0.0, %v1499
        %v1501 = vpop.f32.mrf.mxu0
        %v1502 = vadd.f32 0.0, %v1501
        %1503 = vmatmul.bf16.gmra.mxu0 %v1470
        %v1504 = vpop.f32.mrf.mxu0
        %v1505 = vadd.f32 0.0, %v1504
        %v1506 = vpop.f32.mrf.mxu0
        %v1507 = vadd.f32 0.0, %v1506
        %1508 = vmatmul.bf16.gmra.mxu0 %v1473
        %v1509 = vpop.f32.mrf.mxu0
        %v1510 = vadd.f32 0.0, %v1509
        %v1511 = vpop.f32.mrf.mxu0
        %v1512 = vadd.f32 0.0, %v1511
        %1513 = vmatmul.bf16.gmra.mxu0 %v1476
        %v1514 = vpop.f32.mrf.mxu0
        %v1515 = vadd.f32 0.0, %v1514
        %v1516 = vpop.f32.mrf.mxu0
        %v1517 = vadd.f32 0.0, %v1516
        %1518 = vmatmul.bf16.gmra.mxu0 %v1479
        %v1519 = vpop.f32.mrf.mxu0
        %v1520 = vadd.f32 0.0, %v1519
        %v1521 = vpop.f32.mrf.mxu0
        %v1522 = vadd.f32 0.0, %v1521
        %1523 = vmatmul.bf16.gmra.mxu0 %v1482
        %v1524 = vpop.f32.mrf.mxu0
        %v1525 = vadd.f32 0.0, %v1524
        %v1526 = vpop.f32.mrf.mxu0
        %v1527 = vadd.f32 0.0, %v1526
        %1528 = vmatmul.bf16.gmra.mxu0 %v1485
        %v1529 = vpop.f32.mrf.mxu0
        %v1530 = vadd.f32 0.0, %v1529
        %v1531 = vpop.f32.mrf.mxu0
        %v1532 = vadd.f32 0.0, %v1531
        %1533 = vmatmul.bf16.gmra.mxu0 %v1488
        %v1534 = vpop.f32.mrf.mxu0
        %v1535 = vadd.f32 0.0, %v1534
        %v1536 = vpop.f32.mrf.mxu0
        %v1537 = vadd.f32 0.0, %v1536
        %1538 = vdwg.mxu0
        %1539 = vmax.xlane.f32.xlu0 %v1197
        %v1540 = vpop.xlane.xlu0 %1539
        %1541 = vmax.xlane.f32.xlu0 %v1199
        %v1542 = vpop.xlane.xlu0 %1541
        %1543 = vmax.xlane.f32.xlu0 %v1202
        %v1544 = vpop.xlane.xlu0 %1543
        %1545 = vmax.xlane.f32.xlu0 %v1204
        %v1546 = vpop.xlane.xlu0 %1545
        %1547 = vmax.xlane.f32.xlu0 %v1207
        %v1548 = vpop.xlane.xlu0 %1547
        %1549 = vmax.xlane.f32.xlu0 %v1209
        %v1550 = vpop.xlane.xlu0 %1549
        %1551 = vmax.xlane.f32.xlu0 %v1212
        %v1552 = vpop.xlane.xlu0 %1551
        %1553 = vmax.xlane.f32.xlu0 %v1214
        %v1554 = vpop.xlane.xlu0 %1553
        %1555 = vmax.xlane.f32.xlu0 %v1217
        %v1556 = vpop.xlane.xlu0 %1555
        %1557 = vmax.xlane.f32.xlu0 %v1219
        %v1558 = vpop.xlane.xlu0 %1557
        %1559 = vmax.xlane.f32.xlu0 %v1222
        %v1560 = vpop.xlane.xlu0 %1559
        %1561 = vmax.xlane.f32.xlu0 %v1224
        %v1562 = vpop.xlane.xlu0 %1561
        %1563 = vmax.xlane.f32.xlu0 %v1227
        %v1564 = vpop.xlane.xlu0 %1563
        %1565 = vmax.xlane.f32.xlu0 %v1229
        %v1566 = vpop.xlane.xlu0 %1565
        %1567 = vmax.xlane.f32.xlu0 %v1232
        %v1568 = vpop.xlane.xlu0 %1567
        %1569 = vmax.xlane.f32.xlu0 %v1234
        %v1570 = vpop.xlane.xlu0 %1569
        %1571 = vmax.xlane.f32.xlu0 %v1298
        %v1572 = vpop.xlane.xlu0 %1571
        %1573 = vmax.xlane.f32.xlu0 %v1300
        %v1574 = vpop.xlane.xlu0 %1573
        %1575 = vmax.xlane.f32.xlu0 %v1303
        %v1576 = vpop.xlane.xlu0 %1575
        %1577 = vmax.xlane.f32.xlu0 %v1305
        %v1578 = vpop.xlane.xlu0 %1577
        %1579 = vmax.xlane.f32.xlu0 %v1308
        %v1580 = vpop.xlane.xlu0 %1579
        %1581 = vmax.xlane.f32.xlu0 %v1310
        %v1582 = vpop.xlane.xlu0 %1581
        %1583 = vmax.xlane.f32.xlu0 %v1313
        %v1584 = vpop.xlane.xlu0 %1583
        %1585 = vmax.xlane.f32.xlu0 %v1315
        %v1586 = vpop.xlane.xlu0 %1585
        %1587 = vmax.xlane.f32.xlu0 %v1318
        %v1588 = vpop.xlane.xlu0 %1587
        %1589 = vmax.xlane.f32.xlu0 %v1320
        %v1590 = vpop.xlane.xlu0 %1589
        %1591 = vmax.xlane.f32.xlu0 %v1323
        %v1592 = vpop.xlane.xlu0 %1591
        %1593 = vmax.xlane.f32.xlu0 %v1325
        %v1594 = vpop.xlane.xlu0 %1593
        %1595 = vmax.xlane.f32.xlu0 %v1328
        %v1596 = vpop.xlane.xlu0 %1595
        %1597 = vmax.xlane.f32.xlu0 %v1330
        %v1598 = vpop.xlane.xlu0 %1597
        %1599 = vmax.xlane.f32.xlu0 %v1333
        %v1600 = vpop.xlane.xlu0 %1599
        %1601 = vmax.xlane.f32.xlu0 %v1335
        %v1602 = vpop.xlane.xlu0 %1601
        %1603 = vmax.xlane.f32.xlu0 %v1399
        %v1604 = vpop.xlane.xlu0 %1603
        %1605 = vmax.xlane.f32.xlu0 %v1401
        %v1606 = vpop.xlane.xlu0 %1605
        %1607 = vmax.xlane.f32.xlu0 %v1404
        %v1608 = vpop.xlane.xlu0 %1607
        %1609 = vmax.xlane.f32.xlu0 %v1406
        %v1610 = vpop.xlane.xlu0 %1609
        %1611 = vmax.xlane.f32.xlu0 %v1409
        %v1612 = vpop.xlane.xlu0 %1611
        %1613 = vmax.xlane.f32.xlu0 %v1411
        %v1614 = vpop.xlane.xlu0 %1613
        %1615 = vmax.xlane.f32.xlu0 %v1414
        %v1616 = vpop.xlane.xlu0 %1615
        %1617 = vmax.xlane.f32.xlu0 %v1416
        %v1618 = vpop.xlane.xlu0 %1617
        %1619 = vmax.xlane.f32.xlu0 %v1419
        %v1620 = vpop.xlane.xlu0 %1619
        %1621 = vmax.xlane.f32.xlu0 %v1421
        %v1622 = vpop.xlane.xlu0 %1621
        %1623 = vmax.xlane.f32.xlu0 %v1424
        %v1624 = vpop.xlane.xlu0 %1623
        %1625 = vmax.xlane.f32.xlu0 %v1426
        %v1626 = vpop.xlane.xlu0 %1625
        %1627 = vmax.xlane.f32.xlu0 %v1429
        %v1628 = vpop.xlane.xlu0 %1627
        %1629 = vmax.xlane.f32.xlu0 %v1431
        %v1630 = vpop.xlane.xlu0 %1629
        %1631 = vmax.xlane.f32.xlu0 %v1434
        %v1632 = vpop.xlane.xlu0 %1631
        %1633 = vmax.xlane.f32.xlu0 %v1436
        %v1634 = vpop.xlane.xlu0 %1633
        %1635 = vmax.xlane.f32.xlu0 %v1500
        %v1636 = vpop.xlane.xlu0 %1635
        %1637 = vmax.xlane.f32.xlu0 %v1502
        %v1638 = vpop.xlane.xlu0 %1637
        %1639 = vmax.xlane.f32.xlu0 %v1505
        %v1640 = vpop.xlane.xlu0 %1639
        %1641 = vmax.xlane.f32.xlu0 %v1507
        %v1642 = vpop.xlane.xlu0 %1641
        %1643 = vmax.xlane.f32.xlu0 %v1510
        %v1644 = vpop.xlane.xlu0 %1643
        %1645 = vmax.xlane.f32.xlu0 %v1512
        %v1646 = vpop.xlane.xlu0 %1645
        %1647 = vmax.xlane.f32.xlu0 %v1515
        %v1648 = vpop.xlane.xlu0 %1647
        %1649 = vmax.xlane.f32.xlu0 %v1517
        %v1650 = vpop.xlane.xlu0 %1649
        %1651 = vmax.xlane.f32.xlu0 %v1520
        %v1652 = vpop.xlane.xlu0 %1651
        %1653 = vmax.xlane.f32.xlu0 %v1522
        %v1654 = vpop.xlane.xlu0 %1653
        %1655 = vmax.xlane.f32.xlu0 %v1525
        %v1656 = vpop.xlane.xlu0 %1655
        %1657 = vmax.xlane.f32.xlu0 %v1527
        %v1658 = vpop.xlane.xlu0 %1657
        %1659 = vmax.xlane.f32.xlu0 %v1530
        %v1660 = vpop.xlane.xlu0 %1659
        %1661 = vmax.xlane.f32.xlu0 %v1532
        %v1662 = vpop.xlane.xlu0 %1661
        %1663 = vmax.xlane.f32.xlu0 %v1535
        %v1664 = vpop.xlane.xlu0 %1663
        %1665 = vmax.xlane.f32.xlu0 %v1537
        %v1666 = vpop.xlane.xlu0 %1665
        %v1667 = vsub.f32 %v1197, %v1540
        %v1668 = vsub.f32 %v1199, %v1542
        %v1669 = vsub.f32 %v1202, %v1544
        %v1670 = vsub.f32 %v1204, %v1546
        %v1671 = vsub.f32 %v1207, %v1548
        %v1672 = vsub.f32 %v1209, %v1550
        %v1673 = vsub.f32 %v1212, %v1552
        %v1674 = vsub.f32 %v1214, %v1554
        %v1675 = vsub.f32 %v1217, %v1556
        %v1676 = vsub.f32 %v1219, %v1558
        %v1677 = vsub.f32 %v1222, %v1560
        %v1678 = vsub.f32 %v1224, %v1562
        %v1679 = vsub.f32 %v1227, %v1564
        %v1680 = vsub.f32 %v1229, %v1566
        %v1681 = vsub.f32 %v1232, %v1568
        %v1682 = vsub.f32 %v1234, %v1570
        %v1683 = vsub.f32 %v1298, %v1572
        %v1684 = vsub.f32 %v1300, %v1574
        %v1685 = vsub.f32 %v1303, %v1576
        %v1686 = vsub.f32 %v1305, %v1578
        %v1687 = vsub.f32 %v1308, %v1580
        %v1688 = vsub.f32 %v1310, %v1582
        %v1689 = vsub.f32 %v1313, %v1584
        %v1690 = vsub.f32 %v1315, %v1586
        %v1691 = vsub.f32 %v1318, %v1588
        %v1692 = vsub.f32 %v1320, %v1590
        %v1693 = vsub.f32 %v1323, %v1592
        %v1694 = vsub.f32 %v1325, %v1594
        %v1695 = vsub.f32 %v1328, %v1596
        %v1696 = vsub.f32 %v1330, %v1598
        %v1697 = vsub.f32 %v1333, %v1600
        %v1698 = vsub.f32 %v1335, %v1602
        %v1699 = vsub.f32 %v1399, %v1604
        %v1700 = vsub.f32 %v1401, %v1606
        %v1701 = vsub.f32 %v1404, %v1608
        %v1702 = vsub.f32 %v1406, %v1610
        %v1703 = vsub.f32 %v1409, %v1612
        %v1704 = vsub.f32 %v1411, %v1614
        %v1705 = vsub.f32 %v1414, %v1616
        %v1706 = vsub.f32 %v1416, %v1618
        %v1707 = vsub.f32 %v1419, %v1620
        %v1708 = vsub.f32 %v1421, %v1622
        %v1709 = vsub.f32 %v1424, %v1624
        %v1710 = vsub.f32 %v1426, %v1626
        %v1711 = vsub.f32 %v1429, %v1628
        %v1712 = vsub.f32 %v1431, %v1630
        %v1713 = vsub.f32 %v1434, %v1632
        %v1714 = vsub.f32 %v1436, %v1634
        %v1715 = vsub.f32 %v1500, %v1636
        %v1716 = vsub.f32 %v1502, %v1638
        %v1717 = vsub.f32 %v1505, %v1640
        %v1718 = vsub.f32 %v1507, %v1642
        %v1719 = vsub.f32 %v1510, %v1644
        %v1720 = vsub.f32 %v1512, %v1646
        %v1721 = vsub.f32 %v1515, %v1648
        %v1722 = vsub.f32 %v1517, %v1650
        %v1723 = vsub.f32 %v1520, %v1652
        %v1724 = vsub.f32 %v1522, %v1654
        %v1725 = vsub.f32 %v1525, %v1656
        %v1726 = vsub.f32 %v1527, %v1658
        %v1727 = vsub.f32 %v1530, %v1660
        %v1728 = vsub.f32 %v1532, %v1662
        %v1729 = vsub.f32 %v1535, %v1664
        %v1730 = vsub.f32 %v1537, %v1666
        %v1731 = vpack.c.bf16 %v1667, %v1667
        %v1732 = vpack.c.bf16 %v1668, %v1668
        %v1733 = vpack.c.bf16 %v1669, %v1669
        %v1734 = vpack.c.bf16 %v1670, %v1670
        %v1735 = vpack.c.bf16 %v1671, %v1671
        %v1736 = vpack.c.bf16 %v1672, %v1672
        %v1737 = vpack.c.bf16 %v1673, %v1673
        %v1738 = vpack.c.bf16 %v1674, %v1674
        %v1739 = vpack.c.bf16 %v1675, %v1675
        %v1740 = vpack.c.bf16 %v1676, %v1676
        %v1741 = vpack.c.bf16 %v1677, %v1677
        %v1742 = vpack.c.bf16 %v1678, %v1678
        %v1743 = vpack.c.bf16 %v1679, %v1679
        %v1744 = vpack.c.bf16 %v1680, %v1680
        %v1745 = vpack.c.bf16 %v1681, %v1681
        %v1746 = vpack.c.bf16 %v1682, %v1682
        %v1747 = vpack.c.bf16 %v1683, %v1683
        %v1748 = vpack.c.bf16 %v1684, %v1684
        %v1749 = vpack.c.bf16 %v1685, %v1685
        %v1750 = vpack.c.bf16 %v1686, %v1686
        %v1751 = vpack.c.bf16 %v1687, %v1687
        %v1752 = vpack.c.bf16 %v1688, %v1688
        %v1753 = vpack.c.bf16 %v1689, %v1689
        %v1754 = vpack.c.bf16 %v1690, %v1690
        %v1755 = vpack.c.bf16 %v1691, %v1691
        %v1756 = vpack.c.bf16 %v1692, %v1692
        %v1757 = vpack.c.bf16 %v1693, %v1693
        %v1758 = vpack.c.bf16 %v1694, %v1694
        %v1759 = vpack.c.bf16 %v1695, %v1695
        %v1760 = vpack.c.bf16 %v1696, %v1696
        %v1761 = vpack.c.bf16 %v1697, %v1697
        %v1762 = vpack.c.bf16 %v1698, %v1698
        %v1763 = vpack.c.bf16 %v1699, %v1699
        %v1764 = vpack.c.bf16 %v1700, %v1700
        %v1765 = vpack.c.bf16 %v1701, %v1701
        %v1766 = vpack.c.bf16 %v1702, %v1702
        %v1767 = vpack.c.bf16 %v1703, %v1703
        %v1768 = vpack.c.bf16 %v1704, %v1704
        %v1769 = vpack.c.bf16 %v1705, %v1705
        %v1770 = vpack.c.bf16 %v1706, %v1706
        %v1771 = vpack.c.bf16 %v1707, %v1707
        %v1772 = vpack.c.bf16 %v1708, %v1708
        %v1773 = vpack.c.bf16 %v1709, %v1709
        %v1774 = vpack.c.bf16 %v1710, %v1710
        %v1775 = vpack.c.bf16 %v1711, %v1711
        %v1776 = vpack.c.bf16 %v1712, %v1712
        %v1777 = vpack.c.bf16 %v1713, %v1713
        %v1778 = vpack.c.bf16 %v1714, %v1714
        %v1779 = vpack.c.bf16 %v1715, %v1715
        %v1780 = vpack.c.bf16 %v1716, %v1716
        %v1781 = vpack.c.bf16 %v1717, %v1717
        %v1782 = vpack.c.bf16 %v1718, %v1718
        %v1783 = vpack.c.bf16 %v1719, %v1719
        %v1784 = vpack.c.bf16 %v1720, %v1720
        %v1785 = vpack.c.bf16 %v1721, %v1721
        %v1786 = vpack.c.bf16 %v1722, %v1722
        %v1787 = vpack.c.bf16 %v1723, %v1723
        %v1788 = vpack.c.bf16 %v1724, %v1724
        %v1789 = vpack.c.bf16 %v1725, %v1725
        %v1790 = vpack.c.bf16 %v1726, %v1726
        %v1791 = vpack.c.bf16 %v1727, %v1727
        %v1792 = vpack.c.bf16 %v1728, %v1728
        %v1793 = vpack.c.bf16 %v1729, %v1729
        %v1794 = vpack.c.bf16 %v1730, %v1730
        %v1795 = vunpack.c.l.bf16 %v1731
        %v1796 = vunpack.c.l.bf16 %v1732
        %v1797 = vunpack.c.l.bf16 %v1733
        %v1798 = vunpack.c.l.bf16 %v1734
        %v1799 = vunpack.c.l.bf16 %v1735
        %v1800 = vunpack.c.l.bf16 %v1736
        %v1801 = vunpack.c.l.bf16 %v1737
        %v1802 = vunpack.c.l.bf16 %v1738
        %v1803 = vunpack.c.l.bf16 %v1739
        %v1804 = vunpack.c.l.bf16 %v1740
        %v1805 = vunpack.c.l.bf16 %v1741
        %v1806 = vunpack.c.l.bf16 %v1742
        %v1807 = vunpack.c.l.bf16 %v1743
        %v1808 = vunpack.c.l.bf16 %v1744
        %v1809 = vunpack.c.l.bf16 %v1745
        %v1810 = vunpack.c.l.bf16 %v1746
        %v1811 = vunpack.c.l.bf16 %v1747
        %v1812 = vunpack.c.l.bf16 %v1748
        %v1813 = vunpack.c.l.bf16 %v1749
        %v1814 = vunpack.c.l.bf16 %v1750
        %v1815 = vunpack.c.l.bf16 %v1751
        %v1816 = vunpack.c.l.bf16 %v1752
        %v1817 = vunpack.c.l.bf16 %v1753
        %v1818 = vunpack.c.l.bf16 %v1754
        %v1819 = vunpack.c.l.bf16 %v1755
        %v1820 = vunpack.c.l.bf16 %v1756
        %v1821 = vunpack.c.l.bf16 %v1757
        %v1822 = vunpack.c.l.bf16 %v1758
        %v1823 = vunpack.c.l.bf16 %v1759
        %v1824 = vunpack.c.l.bf16 %v1760
        %v1825 = vunpack.c.l.bf16 %v1761
        %v1826 = vunpack.c.l.bf16 %v1762
        %v1827 = vunpack.c.l.bf16 %v1763
        %v1828 = vunpack.c.l.bf16 %v1764
        %v1829 = vunpack.c.l.bf16 %v1765
        %v1830 = vunpack.c.l.bf16 %v1766
        %v1831 = vunpack.c.l.bf16 %v1767
        %v1832 = vunpack.c.l.bf16 %v1768
        %v1833 = vunpack.c.l.bf16 %v1769
        %v1834 = vunpack.c.l.bf16 %v1770
        %v1835 = vunpack.c.l.bf16 %v1771
        %v1836 = vunpack.c.l.bf16 %v1772
        %v1837 = vunpack.c.l.bf16 %v1773
        %v1838 = vunpack.c.l.bf16 %v1774
        %v1839 = vunpack.c.l.bf16 %v1775
        %v1840 = vunpack.c.l.bf16 %v1776
        %v1841 = vunpack.c.l.bf16 %v1777
        %v1842 = vunpack.c.l.bf16 %v1778
        %v1843 = vunpack.c.l.bf16 %v1779
        %v1844 = vunpack.c.l.bf16 %v1780
        %v1845 = vunpack.c.l.bf16 %v1781
        %v1846 = vunpack.c.l.bf16 %v1782
        %v1847 = vunpack.c.l.bf16 %v1783
        %v1848 = vunpack.c.l.bf16 %v1784
        %v1849 = vunpack.c.l.bf16 %v1785
        %v1850 = vunpack.c.l.bf16 %v1786
        %v1851 = vunpack.c.l.bf16 %v1787
        %v1852 = vunpack.c.l.bf16 %v1788
        %v1853 = vunpack.c.l.bf16 %v1789
        %v1854 = vunpack.c.l.bf16 %v1790
        %v1855 = vunpack.c.l.bf16 %v1791
        %v1856 = vunpack.c.l.bf16 %v1792
        %v1857 = vunpack.c.l.bf16 %v1793
        %v1858 = vunpack.c.l.bf16 %v1794
        %v1859 = vmul.f32 %v1795, 1.442695
        %v1860 = vpow.pop %v1859
        %v1861 = vmul.f32 %v1796, 1.442695
        %v1862 = vpow.pop %v1861
        %v1863 = vmul.f32 %v1797, 1.442695
        %v1864 = vpow.pop %v1863
        %v1865 = vmul.f32 %v1798, 1.442695
        %v1866 = vpow.pop %v1865
        %v1867 = vmul.f32 %v1799, 1.442695
        %v1868 = vpow.pop %v1867
        %v1869 = vmul.f32 %v1800, 1.442695
        %v1870 = vpow.pop %v1869
        %v1871 = vmul.f32 %v1801, 1.442695
        %v1872 = vpow.pop %v1871
        %v1873 = vmul.f32 %v1802, 1.442695
        %v1874 = vpow.pop %v1873
        %v1875 = vmul.f32 %v1803, 1.442695
        %v1876 = vpow.pop %v1875
        %v1877 = vmul.f32 %v1804, 1.442695
        %v1878 = vpow.pop %v1877
        %v1879 = vmul.f32 %v1805, 1.442695
        %v1880 = vpow.pop %v1879
        %v1881 = vmul.f32 %v1806, 1.442695
        %v1882 = vpow.pop %v1881
        %v1883 = vmul.f32 %v1807, 1.442695
        %v1884 = vpow.pop %v1883
        %v1885 = vmul.f32 %v1808, 1.442695
        %v1886 = vpow.pop %v1885
        %v1887 = vmul.f32 %v1809, 1.442695
        %v1888 = vpow.pop %v1887
        %v1889 = vmul.f32 %v1810, 1.442695
        %v1890 = vpow.pop %v1889
        %v1891 = vmul.f32 %v1811, 1.442695
        %v1892 = vpow.pop %v1891
        %v1893 = vmul.f32 %v1812, 1.442695
        %v1894 = vpow.pop %v1893
        %v1895 = vmul.f32 %v1813, 1.442695
        %v1896 = vpow.pop %v1895
        %v1897 = vmul.f32 %v1814, 1.442695
        %v1898 = vpow.pop %v1897
        %v1899 = vmul.f32 %v1815, 1.442695
        %v1900 = vpow.pop %v1899
        %v1901 = vmul.f32 %v1816, 1.442695
        %v1902 = vpow.pop %v1901
        %v1903 = vmul.f32 %v1817, 1.442695
        %v1904 = vpow.pop %v1903
        %v1905 = vmul.f32 %v1818, 1.442695
        %v1906 = vpow.pop %v1905
        %v1907 = vmul.f32 %v1819, 1.442695
        %v1908 = vpow.pop %v1907
        %v1909 = vmul.f32 %v1820, 1.442695
        %v1910 = vpow.pop %v1909
        %v1911 = vmul.f32 %v1821, 1.442695
        %v1912 = vpow.pop %v1911
        %v1913 = vmul.f32 %v1822, 1.442695
        %v1914 = vpow.pop %v1913
        %v1915 = vmul.f32 %v1823, 1.442695
        %v1916 = vpow.pop %v1915
        %v1917 = vmul.f32 %v1824, 1.442695
        %v1918 = vpow.pop %v1917
        %v1919 = vmul.f32 %v1825, 1.442695
        %v1920 = vpow.pop %v1919
        %v1921 = vmul.f32 %v1826, 1.442695
        %v1922 = vpow.pop %v1921
        %v1923 = vmul.f32 %v1827, 1.442695
        %v1924 = vpow.pop %v1923
        %v1925 = vmul.f32 %v1828, 1.442695
        %v1926 = vpow.pop %v1925
        %v1927 = vmul.f32 %v1829, 1.442695
        %v1928 = vpow.pop %v1927
        %v1929 = vmul.f32 %v1830, 1.442695
        %v1930 = vpow.pop %v1929
        %v1931 = vmul.f32 %v1831, 1.442695
        %v1932 = vpow.pop %v1931
        %v1933 = vmul.f32 %v1832, 1.442695
        %v1934 = vpow.pop %v1933
        %v1935 = vmul.f32 %v1833, 1.442695
        %v1936 = vpow.pop %v1935
        %v1937 = vmul.f32 %v1834, 1.442695
        %v1938 = vpow.pop %v1937
        %v1939 = vmul.f32 %v1835, 1.442695
        %v1940 = vpow.pop %v1939
        %v1941 = vmul.f32 %v1836, 1.442695
        %v1942 = vpow.pop %v1941
        %v1943 = vmul.f32 %v1837, 1.442695
        %v1944 = vpow.pop %v1943
        %v1945 = vmul.f32 %v1838, 1.442695
        %v1946 = vpow.pop %v1945
        %v1947 = vmul.f32 %v1839, 1.442695
        %v1948 = vpow.pop %v1947
        %v1949 = vmul.f32 %v1840, 1.442695
        %v1950 = vpow.pop %v1949
        %v1951 = vmul.f32 %v1841, 1.442695
        %v1952 = vpow.pop %v1951
        %v1953 = vmul.f32 %v1842, 1.442695
        %v1954 = vpow.pop %v1953
        %v1955 = vmul.f32 %v1843, 1.442695
        %v1956 = vpow.pop %v1955
        %v1957 = vmul.f32 %v1844, 1.442695
        %v1958 = vpow.pop %v1957
        %v1959 = vmul.f32 %v1845, 1.442695
        %v1960 = vpow.pop %v1959
        %v1961 = vmul.f32 %v1846, 1.442695
        %v1962 = vpow.pop %v1961
        %v1963 = vmul.f32 %v1847, 1.442695
        %v1964 = vpow.pop %v1963
        %v1965 = vmul.f32 %v1848, 1.442695
        %v1966 = vpow.pop %v1965
        %v1967 = vmul.f32 %v1849, 1.442695
        %v1968 = vpow.pop %v1967
        %v1969 = vmul.f32 %v1850, 1.442695
        %v1970 = vpow.pop %v1969
        %v1971 = vmul.f32 %v1851, 1.442695
        %v1972 = vpow.pop %v1971
        %v1973 = vmul.f32 %v1852, 1.442695
        %v1974 = vpow.pop %v1973
        %v1975 = vmul.f32 %v1853, 1.442695
        %v1976 = vpow.pop %v1975
        %v1977 = vmul.f32 %v1854, 1.442695
        %v1978 = vpow.pop %v1977
        %v1979 = vmul.f32 %v1855, 1.442695
        %v1980 = vpow.pop %v1979
        %v1981 = vmul.f32 %v1856, 1.442695
        %v1982 = vpow.pop %v1981
        %v1983 = vmul.f32 %v1857, 1.442695
        %v1984 = vpow.pop %v1983
        %v1985 = vmul.f32 %v1858, 1.442695
        %v1986 = vpow.pop %v1985
        %v1987 = vpack.c.bf16 %v1860, %v1860
        %v1988 = vpack.c.bf16 %v1862, %v1862
        %v1989 = vpack.c.bf16 %v1864, %v1864
        %v1990 = vpack.c.bf16 %v1866, %v1866
        %v1991 = vpack.c.bf16 %v1868, %v1868
        %v1992 = vpack.c.bf16 %v1870, %v1870
        %v1993 = vpack.c.bf16 %v1872, %v1872
        %v1994 = vpack.c.bf16 %v1874, %v1874
        %v1995 = vpack.c.bf16 %v1876, %v1876
        %v1996 = vpack.c.bf16 %v1878, %v1878
        %v1997 = vpack.c.bf16 %v1880, %v1880
        %v1998 = vpack.c.bf16 %v1882, %v1882
        %v1999 = vpack.c.bf16 %v1884, %v1884
        %v2000 = vpack.c.bf16 %v1886, %v1886
        %v2001 = vpack.c.bf16 %v1888, %v1888
        %v2002 = vpack.c.bf16 %v1890, %v1890
        %v2003 = vpack.c.bf16 %v1892, %v1892
        %v2004 = vpack.c.bf16 %v1894, %v1894
        %v2005 = vpack.c.bf16 %v1896, %v1896
        %v2006 = vpack.c.bf16 %v1898, %v1898
        %v2007 = vpack.c.bf16 %v1900, %v1900
        %v2008 = vpack.c.bf16 %v1902, %v1902
        %v2009 = vpack.c.bf16 %v1904, %v1904
        %v2010 = vpack.c.bf16 %v1906, %v1906
        %v2011 = vpack.c.bf16 %v1908, %v1908
        %v2012 = vpack.c.bf16 %v1910, %v1910
        %v2013 = vpack.c.bf16 %v1912, %v1912
        %v2014 = vpack.c.bf16 %v1914, %v1914
        %v2015 = vpack.c.bf16 %v1916, %v1916
        %v2016 = vpack.c.bf16 %v1918, %v1918
        %v2017 = vpack.c.bf16 %v1920, %v1920
        %v2018 = vpack.c.bf16 %v1922, %v1922
        %v2019 = vpack.c.bf16 %v1924, %v1924
        %v2020 = vpack.c.bf16 %v1926, %v1926
        %v2021 = vpack.c.bf16 %v1928, %v1928
        %v2022 = vpack.c.bf16 %v1930, %v1930
        %v2023 = vpack.c.bf16 %v1932, %v1932
        %v2024 = vpack.c.bf16 %v1934, %v1934
        %v2025 = vpack.c.bf16 %v1936, %v1936
        %v2026 = vpack.c.bf16 %v1938, %v1938
        %v2027 = vpack.c.bf16 %v1940, %v1940
        %v2028 = vpack.c.bf16 %v1942, %v1942
        %v2029 = vpack.c.bf16 %v1944, %v1944
        %v2030 = vpack.c.bf16 %v1946, %v1946
        %v2031 = vpack.c.bf16 %v1948, %v1948
        %v2032 = vpack.c.bf16 %v1950, %v1950
        %v2033 = vpack.c.bf16 %v1952, %v1952
        %v2034 = vpack.c.bf16 %v1954, %v1954
        %v2035 = vpack.c.bf16 %v1956, %v1956
        %v2036 = vpack.c.bf16 %v1958, %v1958
        %v2037 = vpack.c.bf16 %v1960, %v1960
        %v2038 = vpack.c.bf16 %v1962, %v1962
        %v2039 = vpack.c.bf16 %v1964, %v1964
        %v2040 = vpack.c.bf16 %v1966, %v1966
        %v2041 = vpack.c.bf16 %v1968, %v1968
        %v2042 = vpack.c.bf16 %v1970, %v1970
        %v2043 = vpack.c.bf16 %v1972, %v1972
        %v2044 = vpack.c.bf16 %v1974, %v1974
        %v2045 = vpack.c.bf16 %v1976, %v1976
        %v2046 = vpack.c.bf16 %v1978, %v1978
        %v2047 = vpack.c.bf16 %v1980, %v1980
        %v2048 = vpack.c.bf16 %v1982, %v1982
        %v2049 = vpack.c.bf16 %v1984, %v1984
        %v2050 = vpack.c.bf16 %v1986, %v1986
        %v2059 = vunpack.c.l.b16 %v1126
        %v2060 = vunpack.c.l.b16 %v1127
        %v2061 = vunpack.c.l.b16 %v1128
        %v2062 = vunpack.c.l.b16 %v1129
        %v2063 = vunpack.c.l.b16 %v1130
        %v2064 = vunpack.c.l.b16 %v1131
        %v2065 = vunpack.c.l.b16 %v1132
        %v2066 = vunpack.c.l.b16 %v1133
        %v2067 = vpack.c.b16 %v2060, %v2059
        %v2068 = vpack.c.b16 %v2062, %v2061
        %v2069 = vpack.c.b16 %v2064, %v2063
        %v2070 = vpack.c.b16 %v2066, %v2065
        %v2091 = vunpack.c.l.b16 %v1987
        %v2092 = vunpack.c.l.b16 %v1988
        %v2093 = vunpack.c.l.b16 %v1989
        %v2094 = vunpack.c.l.b16 %v1990
        %v2095 = vunpack.c.l.b16 %v1991
        %v2096 = vunpack.c.l.b16 %v1992
        %v2097 = vunpack.c.l.b16 %v1993
        %v2098 = vunpack.c.l.b16 %v1994
        %v2099 = vunpack.c.l.b16 %v1995
        %v2100 = vunpack.c.l.b16 %v1996
        %v2101 = vunpack.c.l.b16 %v1997
        %v2102 = vunpack.c.l.b16 %v1998
        %v2103 = vunpack.c.l.b16 %v1999
        %v2104 = vunpack.c.l.b16 %v2000
        %v2105 = vunpack.c.l.b16 %v2001
        %v2106 = vunpack.c.l.b16 %v2002
        %v2107 = vpack.c.b16 %v2092, %v2091
        %v2108 = vpack.c.b16 %v2094, %v2093
        %v2109 = vpack.c.b16 %v2096, %v2095
        %v2110 = vpack.c.b16 %v2098, %v2097
        %v2111 = vpack.c.b16 %v2100, %v2099
        %v2112 = vpack.c.b16 %v2102, %v2101
        %v2113 = vpack.c.b16 %v2104, %v2103
        %v2114 = vpack.c.b16 %v2106, %v2105
        %2123 = vmatpush.bf16.xpose.msra.mxu0 %v2114
        %2124 = vmatpush.bf16.xpose.msra.mxu0 %v2113
        %2125 = vmatpush.bf16.xpose.msra.mxu0 %v2112
        %2126 = vmatpush.bf16.xpose.msra.mxu0 %v2111
        %2127 = vmatpush.bf16.xpose.msra.mxu0 %v2110
        %2128 = vmatpush.bf16.xpose.msra.mxu0 %v2109
        %2129 = vmatpush.bf16.xpose.msra.mxu0 %v2108
        %2130 = vmatpush.bf16.xpose.msra.mxu0 %v2107
        %2131 = vmatmul.bf16.gmra.mxu0 %v2067
        %v2132 = vpop.f32.mrf.mxu0
        %v2133 = vadd.f32 0.0, %v2132
        %v2134 = vpop.f32.mrf.mxu0
        %v2135 = vadd.f32 0.0, %v2134
        %2136 = vmatmul.bf16.gmra.mxu0 1065369472
        %v2137 = vpop.f32.mrf.mxu0
        %v2138 = vadd.f32 0.0, %v2137
        %v2139 = vpop.f32.mrf.mxu0
        %2140 = vdwg.mxu0
        %v2157 = vunpack.c.l.b16 %v2003
        %v2158 = vunpack.c.l.b16 %v2004
        %v2159 = vunpack.c.l.b16 %v2005
        %v2160 = vunpack.c.l.b16 %v2006
        %v2161 = vunpack.c.l.b16 %v2007
        %v2162 = vunpack.c.l.b16 %v2008
        %v2163 = vunpack.c.l.b16 %v2009
        %v2164 = vunpack.c.l.b16 %v2010
        %v2165 = vunpack.c.l.b16 %v2011
        %v2166 = vunpack.c.l.b16 %v2012
        %v2167 = vunpack.c.l.b16 %v2013
        %v2168 = vunpack.c.l.b16 %v2014
        %v2169 = vunpack.c.l.b16 %v2015
        %v2170 = vunpack.c.l.b16 %v2016
        %v2171 = vunpack.c.l.b16 %v2017
        %v2172 = vunpack.c.l.b16 %v2018
        %v2173 = vpack.c.b16 %v2158, %v2157
        %v2174 = vpack.c.b16 %v2160, %v2159
        %v2175 = vpack.c.b16 %v2162, %v2161
        %v2176 = vpack.c.b16 %v2164, %v2163
        %v2177 = vpack.c.b16 %v2166, %v2165
        %v2178 = vpack.c.b16 %v2168, %v2167
        %v2179 = vpack.c.b16 %v2170, %v2169
        %v2180 = vpack.c.b16 %v2172, %v2171
        %2189 = vmatpush.bf16.xpose.msra.mxu0 %v2180
        %2190 = vmatpush.bf16.xpose.msra.mxu0 %v2179
        %2191 = vmatpush.bf16.xpose.msra.mxu0 %v2178
        %2192 = vmatpush.bf16.xpose.msra.mxu0 %v2177
        %2193 = vmatpush.bf16.xpose.msra.mxu0 %v2176
        %2194 = vmatpush.bf16.xpose.msra.mxu0 %v2175
        %2195 = vmatpush.bf16.xpose.msra.mxu0 %v2174
        %2196 = vmatpush.bf16.xpose.msra.mxu0 %v2173
        %2197 = vmatmul.bf16.gmra.mxu0 %v2068
        %v2198 = vpop.f32.mrf.mxu0
        %v2199 = vadd.f32 0.0, %v2198
        %v2200 = vpop.f32.mrf.mxu0
        %v2201 = vadd.f32 0.0, %v2200
        %2202 = vmatmul.bf16.gmra.mxu0 1065369472
        %v2203 = vpop.f32.mrf.mxu0
        %v2204 = vadd.f32 0.0, %v2203
        %v2205 = vpop.f32.mrf.mxu0
        %2206 = vdwg.mxu0
        %v2223 = vunpack.c.l.b16 %v2019
        %v2224 = vunpack.c.l.b16 %v2020
        %v2225 = vunpack.c.l.b16 %v2021
        %v2226 = vunpack.c.l.b16 %v2022
        %v2227 = vunpack.c.l.b16 %v2023
        %v2228 = vunpack.c.l.b16 %v2024
        %v2229 = vunpack.c.l.b16 %v2025
        %v2230 = vunpack.c.l.b16 %v2026
        %v2231 = vunpack.c.l.b16 %v2027
        %v2232 = vunpack.c.l.b16 %v2028
        %v2233 = vunpack.c.l.b16 %v2029
        %v2234 = vunpack.c.l.b16 %v2030
        %v2235 = vunpack.c.l.b16 %v2031
        %v2236 = vunpack.c.l.b16 %v2032
        %v2237 = vunpack.c.l.b16 %v2033
        %v2238 = vunpack.c.l.b16 %v2034
        %v2239 = vpack.c.b16 %v2224, %v2223
        %v2240 = vpack.c.b16 %v2226, %v2225
        %v2241 = vpack.c.b16 %v2228, %v2227
        %v2242 = vpack.c.b16 %v2230, %v2229
        %v2243 = vpack.c.b16 %v2232, %v2231
        %v2244 = vpack.c.b16 %v2234, %v2233
        %v2245 = vpack.c.b16 %v2236, %v2235
        %v2246 = vpack.c.b16 %v2238, %v2237
        %2255 = vmatpush.bf16.xpose.msra.mxu0 %v2246
        %2256 = vmatpush.bf16.xpose.msra.mxu0 %v2245
        %2257 = vmatpush.bf16.xpose.msra.mxu0 %v2244
        %2258 = vmatpush.bf16.xpose.msra.mxu0 %v2243
        %2259 = vmatpush.bf16.xpose.msra.mxu0 %v2242
        %2260 = vmatpush.bf16.xpose.msra.mxu0 %v2241
        %2261 = vmatpush.bf16.xpose.msra.mxu0 %v2240
        %2262 = vmatpush.bf16.xpose.msra.mxu0 %v2239
        %2263 = vmatmul.bf16.gmra.mxu0 %v2069
        %v2264 = vpop.f32.mrf.mxu0
        %v2265 = vadd.f32 0.0, %v2264
        %v2266 = vpop.f32.mrf.mxu0
        %v2267 = vadd.f32 0.0, %v2266
        %2268 = vmatmul.bf16.gmra.mxu0 1065369472
        %v2269 = vpop.f32.mrf.mxu0
        %v2270 = vadd.f32 0.0, %v2269
        %v2271 = vpop.f32.mrf.mxu0
        %2272 = vdwg.mxu0
        %v2289 = vunpack.c.l.b16 %v2035
        %v2290 = vunpack.c.l.b16 %v2036
        %v2291 = vunpack.c.l.b16 %v2037
        %v2292 = vunpack.c.l.b16 %v2038
        %v2293 = vunpack.c.l.b16 %v2039
        %v2294 = vunpack.c.l.b16 %v2040
        %v2295 = vunpack.c.l.b16 %v2041
        %v2296 = vunpack.c.l.b16 %v2042
        %v2297 = vunpack.c.l.b16 %v2043
        %v2298 = vunpack.c.l.b16 %v2044
        %v2299 = vunpack.c.l.b16 %v2045
        %v2300 = vunpack.c.l.b16 %v2046
        %v2301 = vunpack.c.l.b16 %v2047
        %v2302 = vunpack.c.l.b16 %v2048
        %v2303 = vunpack.c.l.b16 %v2049
        %v2304 = vunpack.c.l.b16 %v2050
        %v2305 = vpack.c.b16 %v2290, %v2289
        %v2306 = vpack.c.b16 %v2292, %v2291
        %v2307 = vpack.c.b16 %v2294, %v2293
        %v2308 = vpack.c.b16 %v2296, %v2295
        %v2309 = vpack.c.b16 %v2298, %v2297
        %v2310 = vpack.c.b16 %v2300, %v2299
        %v2311 = vpack.c.b16 %v2302, %v2301
        %v2312 = vpack.c.b16 %v2304, %v2303
        %2321 = vmatpush.bf16.xpose.msra.mxu0 %v2312
        %2322 = vmatpush.bf16.xpose.msra.mxu0 %v2311
        %2323 = vmatpush.bf16.xpose.msra.mxu0 %v2310
        %2324 = vmatpush.bf16.xpose.msra.mxu0 %v2309
        %2325 = vmatpush.bf16.xpose.msra.mxu0 %v2308
        %2326 = vmatpush.bf16.xpose.msra.mxu0 %v2307
        %2327 = vmatpush.bf16.xpose.msra.mxu0 %v2306
        %2328 = vmatpush.bf16.xpose.msra.mxu0 %v2305
        %2329 = vmatmul.bf16.gmra.mxu0 %v2070
        %v2330 = vpop.f32.mrf.mxu0
        %v2331 = vadd.f32 0.0, %v2330
        %v2332 = vpop.f32.mrf.mxu0
        %v2333 = vadd.f32 0.0, %v2332
        %2334 = vmatmul.bf16.gmra.mxu0 1065369472
        %v2335 = vpop.f32.mrf.mxu0
        %v2336 = vadd.f32 0.0, %v2335
        %v2337 = vpop.f32.mrf.mxu0
        %2338 = vdwg.mxu0
        %v2339 = vrcp.pop %v2138
        %v2340 = vrcp.pop %v2204
        %v2341 = vrcp.pop %v2270
        %v2342 = vrcp.pop %v2336
        %v2343 = vperm.slane %v2339, 0
        %v2344 = vperm.slane %v2340, 0
        %v2345 = vperm.slane %v2341, 0
        %v2346 = vperm.slane %v2342, 0
        %v2347 = vmul.f32 %v2133, %v2343
        %v2348 = vmul.f32 %v2135, %v2343
        %v2349 = vmul.f32 %v2199, %v2344
        %v2350 = vmul.f32 %v2201, %v2344
        %v2351 = vmul.f32 %v2265, %v2345
        %v2352 = vmul.f32 %v2267, %v2345
        %v2353 = vmul.f32 %v2331, %v2346
        %v2354 = vmul.f32 %v2333, %v2346
        %v2355 = vpack.c.bf16 %v2348, %v2347
        %v2356 = vpack.c.bf16 %v2350, %v2349
        %v2357 = vpack.c.bf16 %v2352, %v2351
        %v2358 = vpack.c.bf16 %v2354, %v2353
        %2360 = vset.pattern.permute.xlu0 0
        %2361 = vperm.xlu0 %2360, %v394
        %v2362 = vpop.permute.xlu0 %2361
        %2365 = vset.pattern.permute.xlu0 0
        %2366 = vperm.xlu0 %2365, %v395
        %v2367 = vpop.permute.xlu0 %2366
        %2370 = vset.pattern.permute.xlu0 0
        %2371 = vperm.xlu0 %2370, %v396
        %v2372 = vpop.permute.xlu0 %2371
        %2375 = vset.pattern.permute.xlu0 0
        %2376 = vperm.xlu0 %2375, %v397
        %v2377 = vpop.permute.xlu0 %2376
        %2380 = vset.pattern.permute.xlu0 0
        %2381 = vperm.xlu0 %2380, %v398
        %v2382 = vpop.permute.xlu0 %2381
        %2385 = vset.pattern.permute.xlu0 0
        %2386 = vperm.xlu0 %2385, %v399
        %v2387 = vpop.permute.xlu0 %2386
        %2390 = vset.pattern.permute.xlu0 0
        %2391 = vperm.xlu0 %2390, %v400
        %v2392 = vpop.permute.xlu0 %2391
        %2395 = vset.pattern.permute.xlu0 0
        %2396 = vperm.xlu0 %2395, %v401
        %v2397 = vpop.permute.xlu0 %2396
        %v2407 = vunpack.c.l.b16 %v386
        %v2408 = vunpack.c.l.b16 %v387
        %v2409 = vunpack.c.l.b16 %v388
        %v2410 = vunpack.c.l.b16 %v389
        %v2411 = vunpack.c.l.b16 %v390
        %v2412 = vunpack.c.l.b16 %v391
        %v2413 = vunpack.c.l.b16 %v392
        %v2414 = vunpack.c.l.b16 %v393
        %v2415 = vpack.c.b16 %v2408, %v2407
        %v2416 = vpack.c.b16 %v2410, %v2409
        %v2417 = vpack.c.b16 %v2412, %v2411
        %v2418 = vpack.c.b16 %v2414, %v2413
        %v2420 = vsel %vm418, %v2415, 0
        %v2423 = vsel %vm418, %v2416, 0
        %v2426 = vsel %vm418, %v2417, 0
        %v2429 = vsel %vm418, %v2418, 0
        %2431 = vmatpush.bf16.msra.mxu0 0
        %2432 = vmatpush.bf16.msra.mxu0 0
        %2433 = vmatpush.bf16.msra.mxu0 0
        %2434 = vmatpush.bf16.msra.mxu0 0
        %2435 = vmatpush.bf16.msra.mxu0 %v2358
        %2436 = vmatpush.bf16.msra.mxu0 %v2357
        %2437 = vmatpush.bf16.msra.mxu0 %v2356
        %2438 = vmatpush.bf16.msra.mxu0 %v2355
        %2439 = vmatmul.bf16.gmra.mxu0 %v2420
        %v2440 = vpop.f32.mrf.mxu0
        %v2441 = vadd.f32 %v2362, %v2440
        %v2442 = vpop.f32.mrf.mxu0
        %v2443 = vadd.f32 %v2367, %v2442
        %2444 = vmatmul.bf16.gmra.mxu0 %v2423
        %v2445 = vpop.f32.mrf.mxu0
        %v2446 = vadd.f32 %v2372, %v2445
        %v2447 = vpop.f32.mrf.mxu0
        %v2448 = vadd.f32 %v2377, %v2447
        %2449 = vmatmul.bf16.gmra.mxu0 %v2426
        %v2450 = vpop.f32.mrf.mxu0
        %v2451 = vadd.f32 %v2382, %v2450
        %v2452 = vpop.f32.mrf.mxu0
        %v2453 = vadd.f32 %v2387, %v2452
        %2454 = vmatmul.bf16.gmra.mxu0 %v2429
        %v2455 = vpop.f32.mrf.mxu0
        %v2456 = vadd.f32 %v2392, %v2455
        %v2457 = vpop.f32.mrf.mxu0
        %v2458 = vadd.f32 %v2397, %v2457
        %2459 = vdwg.mxu0
        %v2460 = vadd.f32 %v306, %v2441
        %v2461 = vadd.f32 %v307, %v2443
        %v2462 = vadd.f32 %v308, %v2446
        %v2463 = vadd.f32 %v309, %v2448
        %v2464 = vadd.f32 %v310, %v2451
        %v2465 = vadd.f32 %v311, %v2453
        %v2466 = vadd.f32 %v312, %v2456
        %v2467 = vadd.f32 %v313, %v2458
        %2468 = vst [vmem:[%s298] sm:$0xff] %v2460
        %2469 = vst [vmem:[%s298 + $0x8] sm:$0xff] %v2461
        %2470 = vst [vmem:[%s298 + $0x10] sm:$0xff] %v2462
        %2471 = vst [vmem:[%s298 + $0x18] sm:$0xff] %v2463
        %2472 = vst [vmem:[%s298 + $0x20] sm:$0xff] %v2464
        %2473 = vst [vmem:[%s298 + $0x28] sm:$0xff] %v2465
        %2474 = vst [vmem:[%s298 + $0x30] sm:$0xff] %v2466
        %2475 = vst [vmem:[%s298 + $0x38] sm:$0xff] %v2467
        %s2476 = sand.u32 %s203, 1
        %s2477 = scalar_lea.sflag [#allocation3], %s2476
        %s2478 = sand.u32 %s203, 1
        %s2479 = smul.addr %s2478, 64
        %s2480 = scalar_lea.vmem [#allocation2], %s2479
        // Predicated region
        $region53: #{tpu_custom_call.1} parent=51 // pred_check
          %p2481 = pneg %p213
        $region54: #{tpu_custom_call.1} parent=51 // pred_check_branch
          %2483 = sbr.rel (%p2481) target = $region56
        $region55: #{tpu_custom_call.1} parent=51 // pred_region
          %2485 = vsyncadd %s2477, 0
          %s2486 = smul.addr %s22, 8
          %s2487 = smul.addr %s2486, 8
          %s2488 = scalar_lea.hbm %s8, %s2487
          %s2489 = sshll.u32 %s2480, 4
          %s2490 = int_to_ptr.vmem [resolvable:$true] %s2489
          %s2491 = sshll.u32 %s2488, 4
          %s2492 = int_to_ptr.hbm [resolvable:$true] %s2491
          %2497 = dma.vmem_to_hbm [thread:$0]  %s2490, 1024, %s2492, %s2477, 128, 128, 8
        $region56: #{tpu_custom_call.1} parent=51 // pred_fallthru
          _
      $region52: #{tpu_custom_call.1} parent=5 // pred_fallthru
        _
      %p2498 = scmp.le.s32.totalorder 2, %s17
      // Predicated region
      $region57: #{tpu_custom_call.1} parent=5 // pred_check
        %p2499 = pneg %p2498
      $region58: #{tpu_custom_call.1} parent=5 // pred_check_branch
        %2501 = sbr.rel (%p2499) target = $region60
      $region59: #{tpu_custom_call.1} parent=5 // pred_region
        %s2502 = ssub.s32 %s17, 2
        // Predicated region
        $region61: #{tpu_custom_call.1} parent=59 // pred_check
          %p2503 = pneg %p219
        $region62: #{tpu_custom_call.1} parent=59 // pred_check_branch
          %2505 = sbr.rel (%p2503) target = $region64
        $region63: #{tpu_custom_call.1} parent=59 // pred_region
          %s2506 = sand.u32 %s204, 1
          %s2507 = scalar_lea.sflag [#allocation3], %s2506
          %s2508 = sand.u32 %s204, 1
          %s2509 = smul.addr %s2508, 64
          %s2510 = scalar_lea.vmem [#allocation2], %s2509
          %2512 = dma.done %s2507, 1024
        $region64: #{tpu_custom_call.1} parent=59 // pred_fallthru
          _
      $region60: #{tpu_custom_call.1} parent=5 // pred_fallthru
        _
    $region6: #{tpu_custom_call.1} parent=1 // loop_footer
      %s21 = sadd.s32 1, %s17
    $region7: #{tpu_custom_call.1} parent=1 // loop_footer_branch
      %16 = sbr.rel target = $region3
    $region8: #{tpu_custom_call.1} parent=1 // loop_exit
      _
    %2513 = vsyncpa [#allocation3], 1
    %s2514 = scalar_lea.sflag [#allocation3], 1
    %2515 = vsyncpa %s2514, 1

</llo_original>
